<compile_context>
chip_gen: v7x
topology: tpu7x:2x2x1
jax: 0.10.0
libtpu: 0.0.40
codegen_flags: <defaults>
</compile_context>

<pallas_src>
import math

import jax
import jax.numpy as jnp
from jax.experimental import pallas as pl
from jax.experimental.pallas import tpu as pltpu

TEMP = 0.2        # BinaryConcrete temperature (torch.full_like(logits, 0.2))
L_STRETCH = -0.2  # RectifiedStreched l
R_STRETCH = 1.0   # RectifiedStreched r
_V0 = (0.0 - L_STRETCH) / (R_STRETCH - L_STRETCH)        # = 1/6
_C0 = math.log(_V0) - math.log(1.0 - _V0)                # logit(1/6) == log(-l/r)


def _logistic_noise(key, shape):
    # Kept outside the kernel (instead of pltpu.prng_*) so the pure-JAX reference
    # can reproduce exactly the same stochastic sample; it is a tiny (M, Le) stream.
    u = jax.random.uniform(key, shape, jnp.float32, 1e-6, 1.0 - 1e-6)
    return jnp.log(u) - jnp.log1p(-u)


# --------------------------------------------------------------------------- kernel

def _make_kernel(num_layers, max_activation, has_placeholder):
    def kernel(*refs):
        # refs layout:
        #   hs_0..hs_{Le-1} : (tm, H)  f32 hidden-state row tiles
        #   w1t             : (Le, H, Ha) bf16   first weight-normed linear, transposed
        #   b1              : (Le, Ha) f32
        #   w2              : (Le, Ha) f32       second linear (Ha -> 1)
        #   b2              : (1, Le)  f32
        #   gb              : (1, Le)  f32       MLPMaxGate.bias (init 5.0)
        #   eps             : (tm, Le) f32       logistic noise log(u) - log(1-u)
        #   [ph]            : (tm, H)  f32       per-position placeholder (optional)
        #   out, gates_full, l0_full              outputs
        hs_refs = refs[:num_layers]
        w1t_ref, b1_ref, w2_ref, b2_ref, gb_ref, eps_ref = (
            refs[num_layers:num_layers + 6])
        k = num_layers + 6
        ph_ref = None
        if has_placeholder:
            ph_ref = refs[k]
            k += 1
        out_ref, gates_ref, l0_ref = refs[k], refs[k + 1], refs[k + 2]

        x0 = None
        cols = []
        for i in range(num_layers):          # static loop, L is small
            x = hs_refs[i][...]              # (tm, H) f32
            if i == 0:
                x0 = x
            # Single bf16 MXU pass, f32 accumulation (Precision.HIGHEST dropped).
            h = jnp.tanh(
                jnp.dot(x.astype(jnp.bfloat16), w1t_ref[i],
                        preferred_element_type=jnp.float32)
                + b1_ref[i:i + 1, :])                                # (tm, Ha)
            cols.append(jnp.sum(h * w2_ref[i:i + 1, :], axis=-1,
                                keepdims=True))                      # (tm, 1)

        # Batch the remaining gate math across layers: one (tm, Le) tile, one store
        # per output per grid step (no per-layer (tm, 1) column writes).
        s = cols[0] if num_layers == 1 else jnp.concatenate(cols, axis=-1)
        logits = jnp.tanh(s + b2_ref[...]) * max_activation + gb_ref[...]

        # RectifiedStreched(BinaryConcrete(0.2, logits), l=-0.2, r=1).rsample()
        y = jax.nn.sigmoid((logits + eps_ref[...]) / TEMP)
        gates = jnp.clip(y * (R_STRETCH - L_STRETCH) + L_STRETCH, 0.0, 1.0)
        gates_ref[...] = gates
        # dist.log_expected_L0()
        l0_ref[...] = -jax.nn.softplus(_C0 * TEMP - logits)

        g0 = gates[:, 0:1]
        if has_placeholder:
            out_ref[...] = x0 * g0 + ph_ref[...] * (1.0 - g0)
        else:
            # placeholder=False path: the buffer is all zeros -> skip the blend
            # and the placeholder DMA stream entirely.
            out_ref[...] = x0 * g0

    return kernel


# ----------------------------------------------------------------- tiling / VMEM

def _vmem_bytes(Le, tm, H, Ha, has_placeholder):
    """Per-call VMEM estimate assuming every BlockSpec is double-buffered."""
    db = 2
    hid = Le * tm * H * 4                      # f32 hidden-state tiles
    w1t = Le * H * Ha * 2                      # bf16 first-linear weights
    small = 2 * Le * Ha * 4 + 2 * Le * 4       # b1, w2, b2, gate bias
    eps = tm * Le * 4
    ph = tm * H * 4 if has_placeholder else 0
    outs = tm * H * 4 + 2 * tm * Le * 4
    return db * (hid + w1t + small + eps + ph + outs)


def _vmem_budget():
    # v7x: 64 MiB VMEM / TensorCore; v5e/v6e: 128 MiB.  Keep ~30% headroom for
    # compiler scratch / relayouts.  Fall back to the most restrictive (v7x).
    try:
        cap = pltpu.get_tpu_info().vmem_capacity_bytes
    except Exception:
        cap = 64 * 1024 * 1024
    return int(cap * 0.7)


def _pick_tm(M, Le, H, Ha, has_placeholder, budget, max_rows=1024):
    """Largest multiple-of-8 row tile dividing M that fits the VMEM budget.

    Prefers >=2 grid steps when tiles stay >=256 rows so the 'parallel' grid
    axis can actually split across v7x's two TensorCores.
    """
    divs = [d for d in range(8, M + 1, 8) if M % d == 0] or [M]
    fits = [d for d in divs
            if d <= max_rows and _vmem_bytes(Le, d, H, Ha, has_placeholder) <= budget]
    if not fits:
        return min(divs)
    multi = [d for d in fits if d <= M // 2]
    if multi and max(multi) >= 256:
        return max(multi)
    return max(fits)


# --------------------------------------------------------------------------- wrapper

def diffmask_gate_hidden(hidden_states, mask, layer_pred, params, noise_key, *,
                         max_activation=10.0, has_placeholder=False, tm=None):
    """Pallas implementation of DiffMaskGateHidden.forward.

    `mask` is unused by the reference forward (kept for signature parity).
    `has_placeholder` mirrors the torch ctor flag: False -> zeros buffer (skipped).
    """
    del mask
    num_layers = len(hidden_states)
    B, S, H = hidden_states[0].shape
    Ha = params["w1"].shape[1]
    M = B * S

    if layer_pred is not None:
        sl = slice(layer_pred, layer_pred + 1)
        ph_idx = layer_pred
    else:
        sl = slice(0, num_layers)
        ph_idx = 0
    Le = sl.stop - sl.start

    # Hidden states are passed as Le separate (M, H) inputs; the (B,S,H)->(M,H)
    # reshape is free, so there is no extra HBM materialization of a stacked tensor.
    hs_list = [hidden_states[i].reshape(M, H) for i in range(sl.start, sl.stop)]

    # Gate-MLP weights (tiny vs. the hidden streams).  w1^T goes to bf16 for a
    # single-pass MXU matmul; everything downstream stays f32.
    w1t = jnp.transpose(params["w1"][sl], (0, 2, 1)).astype(jnp.bfloat16)  # (Le,H,Ha)
    b1 = params["b1"][sl].astype(jnp.float32)                              # (Le, Ha)
    w2 = params["w2"][sl].astype(jnp.float32)                              # (Le, Ha)
    b2 = params["b2"][sl].reshape(1, Le).astype(jnp.float32)               # (1, Le)
    gb = params["gate_bias"][sl].reshape(1, Le).astype(jnp.float32)        # (1, Le)

    eps = _logistic_noise(noise_key, (M, Le))                              # (M, Le)

    if has_placeholder:
        # Learned placeholder: (1, max_pos, H) rows -> per-position (M, H) stream.
        ph = params["placeholder"][ph_idx]
        ph_full = jnp.broadcast_to(ph[:, :S, :], (B, S, H)).reshape(M, H)

    budget = _vmem_budget()
    if tm is None:
        tm = _pick_tm(M, Le, H, Ha, has_placeholder, budget)
    est = _vmem_bytes(Le, tm, H, Ha, has_placeholder)
    vmem_limit = int(min(max(est * 1.3, 32 << 20) + (4 << 20), 100 << 20))

    in_specs = [pl.BlockSpec((tm, H), lambda i: (i, 0)) for _ in range(Le)]
    in_specs += [
        # Grid-invariant weight/bias blocks (constant index_map -> no re-DMA across
        # steps).  On v7x, if the weight block dominates VMEM at production sizes,
        # these can additionally be single-buffered via pipeline_mode=pl.Buffered(1).
        pl.BlockSpec((Le, H, Ha), lambda i: (0, 0, 0)),   # w1^T (bf16)
        pl.BlockSpec((Le, Ha), lambda i: (0, 0)),         # b1
        pl.BlockSpec((Le, Ha), lambda i: (0, 0)),         # w2
        pl.BlockSpec((1, Le), lambda i: (0, 0)),          # b2
        pl.BlockSpec((1, Le), lambda i: (0, 0)),          # gate bias (5.0)
        pl.BlockSpec((tm, Le), lambda i: (i, 0)),         # logistic noise
    ]
    inputs = list(hs_list) + [w1t, b1, w2, b2, gb, eps]
    if has_placeholder:
        in_specs.append(pl.BlockSpec((tm, H), lambda i: (i, 0)))
        inputs.append(ph_full)

    kernel = _make_kernel(Le, max_activation, has_placeholder)
    out, gates_full, l0_full = pl.pallas_call(
        kernel,
        out_shape=(
            jax.ShapeDtypeStruct((M, H), jnp.float32),
            jax.ShapeDtypeStruct((M, Le), jnp.float32),
            jax.ShapeDtypeStruct((M, Le), jnp.float32),
        ),
        grid_spec=pltpu.PrefetchScalarGridSpec(
            num_scalar_prefetch=0,
            grid=(M // tm,),
            in_specs=in_specs,
            out_specs=[
                pl.BlockSpec((tm, H), lambda i: (i, 0)),
                pl.BlockSpec((tm, Le), lambda i: (i, 0)),
                pl.BlockSpec((tm, Le), lambda i: (i, 0)),
            ],
        ),
        compiler_params=pltpu.CompilerParams(
            dimension_semantics=("parallel",),
            vmem_limit_bytes=vmem_limit),
    )(*inputs)

    out = out.reshape(B, S, H)
    gates_full = gates_full.reshape(B, S, Le)
    l0_full = l0_full.reshape(B, S, Le)
    # gates / expected_L0 are column 0 in both the layer_pred and None paths.
    return out, gates_full[..., 0], l0_full[..., 0], gates_full, l0_full


# ---------------------------------------------------------------- params / reference

def init_params(key, num_layers, hidden_size, hidden_attention,
                max_position_embeddings, gate_bias=True):
    """Deterministic synthetic parameters (shapes match the torch module)."""
    k1, k2, k3, k4 = jax.random.split(key, 4)
    # weight_norm(Linear): w = g * v / ||v|| (per output row); at init g = ||v||.
    v1 = 0.1 * jax.random.normal(k1, (num_layers, hidden_attention, hidden_size),
                                 jnp.float32)
    n1 = jnp.linalg.norm(v1, axis=-1, keepdims=True)
    w1 = n1 * v1 / n1
    b1 = 0.05 * jax.random.normal(k2, (num_layers, hidden_attention), jnp.float32)
    v2 = 0.1 * jax.random.normal(k3, (num_layers, hidden_attention), jnp.float32)
    n2 = jnp.linalg.norm(v2, axis=-1, keepdims=True)
    w2 = n2 * v2 / n2
    if gate_bias:
        b2 = 0.05 * jax.random.normal(k4, (num_layers, 1), jnp.float32)
    else:
        b2 = jnp.zeros((num_layers, 1), jnp.float32)
    return dict(
        w1=w1, b1=b1, w2=w2, b2=b2,
        gate_bias=jnp.full((num_layers, 1), 5.0, jnp.float32),   # MLPMaxGate.bias
        # register_buffer('placeholder', zeros((L, 1, 1, H)))  [placeholder=False]
        placeholder=jnp.zeros((num_layers, 1, 1, hidden_size), jnp.float32),
    )


def reference_forward(hidden_states, mask, layer_pred, params, noise_key,
                      max_activation=10.0):
    """Pure-JAX transcription of the torch forward (verification oracle).

    Uses the same bf16-operand / f32-accumulate matmul convention as the kernel so
    the comparison isolates kernel bugs rather than MXU operand-rounding choices.
    """
    del mask
    num_layers = len(hidden_states)
    B, S, H = hidden_states[0].shape

    def gate(i, x):
        w1b = params["w1"][i].T.astype(jnp.bfloat16)
        h = jnp.tanh(jnp.dot(x.astype(jnp.bfloat16), w1b,
                             preferred_element_type=jnp.float32) + params["b1"][i])
        z = jnp.tanh(jnp.sum(h * params["w2"][i], axis=-1, keepdims=True)
                     + params["b2"][i])
        return z * max_activation + params["gate_bias"][i, 0]

    if layer_pred is not None:
        logits = gate(layer_pred, hidden_states[layer_pred])
    else:
        logits = jnp.concatenate(
            [gate(i, hidden_states[i]) for i in range(num_layers)], -1)

    eps = _logistic_noise(noise_key, (B * S, logits.shape[-1])).reshape(logits.shape)
    y = jax.nn.sigmoid((logits + eps) / TEMP)
    gates_full = jnp.clip(y * (R_STRETCH - L_STRETCH) + L_STRETCH, 0.0, 1.0)
    l0_full = -jax.nn.softplus(_C0 * TEMP - logits)

    gates = gates_full if layer_pred is not None else gates_full[..., :1]
    l0 = l0_full if layer_pred is not None else l0_full[..., :1]
    idx = layer_pred if layer_pred is not None else 0
    ph = params["placeholder"][idx][:, :S]
    out = hidden_states[idx] * gates + ph * (1.0 - gates)
    return out, gates.squeeze(-1), l0.squeeze(-1), gates_full, l0_full


# --------------------------------------------------------------------------- main

if __name__ == "__main__":
    B, S, H, Ha, L = 2, 64, 32, 16, 3
    MAX_POS = 128

    root = jax.random.PRNGKey(0)
    k_params, k_hidden, k_noise, k_ph = jax.random.split(root, 4)
    params = init_params(k_params, L, H, Ha, MAX_POS)
    hkeys = jax.random.split(k_hidden, L)
    hidden_states = [jax.random.normal(hkeys[i], (B, S, H), jnp.float32)
                     for i in range(L)]
    mask = jnp.ones((B, S), jnp.float32)

    # placeholder=True variant of the module: learned (1, max_pos, H) rows per layer.
    params_ph = dict(params)
    params_ph["placeholder"] = 0.3 * jax.random.normal(
        k_ph, (L, 1, MAX_POS, H), jnp.float32)

    cases = [
        (None, params, False),
        (1, params, False),
        (None, params_ph, True),
        (2, params_ph, True),
    ]
    for layer_pred, p, has_ph in cases:
        outs = diffmask_gate_hidden(hidden_states, mask, layer_pred, p, k_noise,
                                    has_placeholder=has_ph)
        refs = reference_forward(hidden_states, mask, layer_pred, p, k_noise)
        for o, r in zip(outs, refs):
            o = jax.block_until_ready(o)
            assert o.shape == r.shape, (o.shape, r.shape)
            assert jnp.allclose(o, r, atol=2e-3, rtol=2e-3), "mismatch vs reference"

    print("KERNEL_OK")
</pallas_src>

<mosaic_0001>
module attributes {stable_mosaic.version = 11 : i64} {
  func.func @kernel(%arg0: i32, %arg1: memref<128x32xf32, #tpu.memory_space<vmem>>, %arg2: memref<128x32xf32, #tpu.memory_space<vmem>>, %arg3: memref<128x32xf32, #tpu.memory_space<vmem>>, %arg4: memref<3x32x16xbf16, #tpu.memory_space<vmem>>, %arg5: memref<3x16xf32, #tpu.memory_space<vmem>>, %arg6: memref<3x16xf32, #tpu.memory_space<vmem>>, %arg7: memref<1x3xf32, #tpu.memory_space<vmem>>, %arg8: memref<1x3xf32, #tpu.memory_space<vmem>>, %arg9: memref<128x3xf32, #tpu.memory_space<vmem>>, %arg10: memref<128x32xf32, #tpu.memory_space<vmem>>, %arg11: memref<128x3xf32, #tpu.memory_space<vmem>>, %arg12: memref<128x3xf32, #tpu.memory_space<vmem>>) attributes {dimension_semantics = [#tpu.dimension_semantics<parallel>], iteration_bounds = array<i64: 1>, scalar_prefetch = 0 : i64, scratch_operands = 0 : i64, tpu.core_type = #tpu.core_type<tc>, window_params = [{transform_indices = @transform_0, window_bounds = array<i64: 128, 32>}, {transform_indices = @transform_1, window_bounds = array<i64: 128, 32>}, {transform_indices = @transform_2, window_bounds = array<i64: 128, 32>}, {pipeline_mode = #tpu.pipeline_mode<synchronous>, transform_indices = @transform_3, window_bounds = array<i64: 3, 32, 16>}, {pipeline_mode = #tpu.pipeline_mode<synchronous>, transform_indices = @transform_4, window_bounds = array<i64: 3, 16>}, {pipeline_mode = #tpu.pipeline_mode<synchronous>, transform_indices = @transform_5, window_bounds = array<i64: 3, 16>}, {pipeline_mode = #tpu.pipeline_mode<synchronous>, transform_indices = @transform_6, window_bounds = array<i64: 1, 3>}, {pipeline_mode = #tpu.pipeline_mode<synchronous>, transform_indices = @transform_7, window_bounds = array<i64: 1, 3>}, {transform_indices = @transform_8, window_bounds = array<i64: 128, 3>}, {transform_indices = @transform_9, window_bounds = array<i64: 128, 32>}, {transform_indices = @transform_10, window_bounds = array<i64: 128, 3>}, {transform_indices = @transform_11, window_bounds = array<i64: 128, 3>}]} {
    %c0 = arith.constant 0 : index
    %c0_0 = arith.constant 0 : index
    %0 = vector.load %arg1[%c0, %c0_0] : memref<128x32xf32, #tpu.memory_space<vmem>>, vector<128x32xf32>
    %1 = arith.truncf %0 : vector<128x32xf32> to vector<128x32xbf16>
    %c0_1 = arith.constant 0 : index
    %c0_2 = arith.constant 0 : index
    %c0_3 = arith.constant 0 : index
    %2 = vector.load %arg4[%c0_1, %c0_2, %c0_3] : memref<3x32x16xbf16, #tpu.memory_space<vmem>>, vector<1x32x16xbf16>
    %3 = vector.shape_cast %2 : vector<1x32x16xbf16> to vector<32x16xbf16>
    %cst = arith.constant dense<0.000000e+00> : vector<128x16xf32>
    %4 = tpu.matmul %1, %3, %cst {dimension_numbers = #tpu.dot_dimension_numbers<[1], [0], [0], [1], [0, 0, 1, 1], [], []>} : vector<128x32xbf16>, vector<32x16xbf16>, vector<128x16xf32> -> vector<128x16xf32>
    %c0_4 = arith.constant 0 : index
    %c0_5 = arith.constant 0 : index
    %5 = vector.load %arg5[%c0_4, %c0_5] : memref<3x16xf32, #tpu.memory_space<vmem>>, vector<1x16xf32>
    %6 = vector.broadcast %5 : vector<1x16xf32> to vector<128x16xf32>
    %7 = arith.addf %4, %6 : vector<128x16xf32>
    %8 = math.tanh %7 : vector<128x16xf32>
    %c0_6 = arith.constant 0 : index
    %c0_7 = arith.constant 0 : index
    %9 = vector.load %arg6[%c0_6, %c0_7] : memref<3x16xf32, #tpu.memory_space<vmem>>, vector<1x16xf32>
    %10 = vector.broadcast %9 : vector<1x16xf32> to vector<128x16xf32>
    %11 = arith.mulf %8, %10 : vector<128x16xf32>
    %cst_8 = arith.constant dense<0.000000e+00> : vector<128xf32>
    %12 = vector.multi_reduction <add>, %11, %cst_8 [1] : vector<128x16xf32> to vector<128xf32>
    %13 = vector.shape_cast %12 : vector<128xf32> to vector<128x1xf32>
    %c0_9 = arith.constant 0 : index
    %c0_10 = arith.constant 0 : index
    %14 = vector.load %arg2[%c0_9, %c0_10] : memref<128x32xf32, #tpu.memory_space<vmem>>, vector<128x32xf32>
    %15 = arith.truncf %14 : vector<128x32xf32> to vector<128x32xbf16>
    %c1 = arith.constant 1 : index
    %c0_11 = arith.constant 0 : index
    %c0_12 = arith.constant 0 : index
    %16 = vector.load %arg4[%c1, %c0_11, %c0_12] : memref<3x32x16xbf16, #tpu.memory_space<vmem>>, vector<1x32x16xbf16>
    %17 = vector.shape_cast %16 : vector<1x32x16xbf16> to vector<32x16xbf16>
    %cst_13 = arith.constant dense<0.000000e+00> : vector<128x16xf32>
    %18 = tpu.matmul %15, %17, %cst_13 {dimension_numbers = #tpu.dot_dimension_numbers<[1], [0], [0], [1], [0, 0, 1, 1], [], []>} : vector<128x32xbf16>, vector<32x16xbf16>, vector<128x16xf32> -> vector<128x16xf32>
    %c1_14 = arith.constant 1 : index
    %c0_15 = arith.constant 0 : index
    %19 = vector.load %arg5[%c1_14, %c0_15] : memref<3x16xf32, #tpu.memory_space<vmem>>, vector<1x16xf32>
    %20 = vector.broadcast %19 : vector<1x16xf32> to vector<128x16xf32>
    %21 = arith.addf %18, %20 : vector<128x16xf32>
    %22 = math.tanh %21 : vector<128x16xf32>
    %c1_16 = arith.constant 1 : index
    %c0_17 = arith.constant 0 : index
    %23 = vector.load %arg6[%c1_16, %c0_17] : memref<3x16xf32, #tpu.memory_space<vmem>>, vector<1x16xf32>
    %24 = vector.broadcast %23 : vector<1x16xf32> to vector<128x16xf32>
    %25 = arith.mulf %22, %24 : vector<128x16xf32>
    %cst_18 = arith.constant dense<0.000000e+00> : vector<128xf32>
    %26 = vector.multi_reduction <add>, %25, %cst_18 [1] : vector<128x16xf32> to vector<128xf32>
    %27 = vector.shape_cast %26 : vector<128xf32> to vector<128x1xf32>
    %c0_19 = arith.constant 0 : index
    %c0_20 = arith.constant 0 : index
    %28 = vector.load %arg3[%c0_19, %c0_20] : memref<128x32xf32, #tpu.memory_space<vmem>>, vector<128x32xf32>
    %29 = arith.truncf %28 : vector<128x32xf32> to vector<128x32xbf16>
    %c2 = arith.constant 2 : index
    %c0_21 = arith.constant 0 : index
    %c0_22 = arith.constant 0 : index
    %30 = vector.load %arg4[%c2, %c0_21, %c0_22] : memref<3x32x16xbf16, #tpu.memory_space<vmem>>, vector<1x32x16xbf16>
    %31 = vector.shape_cast %30 : vector<1x32x16xbf16> to vector<32x16xbf16>
    %cst_23 = arith.constant dense<0.000000e+00> : vector<128x16xf32>
    %32 = tpu.matmul %29, %31, %cst_23 {dimension_numbers = #tpu.dot_dimension_numbers<[1], [0], [0], [1], [0, 0, 1, 1], [], []>} : vector<128x32xbf16>, vector<32x16xbf16>, vector<128x16xf32> -> vector<128x16xf32>
    %c2_24 = arith.constant 2 : index
    %c0_25 = arith.constant 0 : index
    %33 = vector.load %arg5[%c2_24, %c0_25] : memref<3x16xf32, #tpu.memory_space<vmem>>, vector<1x16xf32>
    %34 = vector.broadcast %33 : vector<1x16xf32> to vector<128x16xf32>
    %35 = arith.addf %32, %34 : vector<128x16xf32>
    %36 = math.tanh %35 : vector<128x16xf32>
    %c2_26 = arith.constant 2 : index
    %c0_27 = arith.constant 0 : index
    %37 = vector.load %arg6[%c2_26, %c0_27] : memref<3x16xf32, #tpu.memory_space<vmem>>, vector<1x16xf32>
    %38 = vector.broadcast %37 : vector<1x16xf32> to vector<128x16xf32>
    %39 = arith.mulf %36, %38 : vector<128x16xf32>
    %cst_28 = arith.constant dense<0.000000e+00> : vector<128xf32>
    %40 = vector.multi_reduction <add>, %39, %cst_28 [1] : vector<128x16xf32> to vector<128xf32>
    %41 = vector.shape_cast %40 : vector<128xf32> to vector<128x1xf32>
    %42 = tpu.concatenate %13, %27, %41 in 1 : vector<128x1xf32>, vector<128x1xf32>, vector<128x1xf32> -> vector<128x3xf32>
    %c0_29 = arith.constant 0 : index
    %c0_30 = arith.constant 0 : index
    %43 = vector.load %arg7[%c0_29, %c0_30] : memref<1x3xf32, #tpu.memory_space<vmem>>, vector<1x3xf32>
    %44 = vector.broadcast %43 : vector<1x3xf32> to vector<128x3xf32>
    %45 = arith.addf %42, %44 : vector<128x3xf32>
    %46 = math.tanh %45 : vector<128x3xf32>
    %cst_31 = arith.constant 1.000000e+01 : f32
    %47 = vector.broadcast %cst_31 : f32 to vector<128x3xf32>
    %48 = arith.mulf %46, %47 : vector<128x3xf32>
    %c0_32 = arith.constant 0 : index
    %c0_33 = arith.constant 0 : index
    %49 = vector.load %arg8[%c0_32, %c0_33] : memref<1x3xf32, #tpu.memory_space<vmem>>, vector<1x3xf32>
    %50 = vector.broadcast %49 : vector<1x3xf32> to vector<128x3xf32>
    %51 = arith.addf %48, %50 : vector<128x3xf32>
    %c0_34 = arith.constant 0 : index
    %c0_35 = arith.constant 0 : index
    %52 = vector.load %arg9[%c0_34, %c0_35] : memref<128x3xf32, #tpu.memory_space<vmem>>, vector<128x3xf32>
    %53 = arith.addf %51, %52 : vector<128x3xf32>
    %cst_36 = arith.constant 2.000000e-01 : f32
    %54 = vector.broadcast %cst_36 : f32 to vector<128x3xf32>
    %55 = arith.divf %53, %54 : vector<128x3xf32>
    %56 = arith.negf %55 : vector<128x3xf32>
    %57 = math.exp %56 : vector<128x3xf32>
    %cst_37 = arith.constant 1.000000e+00 : f32
    %58 = vector.broadcast %cst_37 : f32 to vector<128x3xf32>
    %59 = arith.addf %58, %57 : vector<128x3xf32>
    %60 = arith.divf %58, %59 : vector<128x3xf32>
    %cst_38 = arith.constant 1.200000e+00 : f32
    %61 = vector.broadcast %cst_38 : f32 to vector<128x3xf32>
    %62 = arith.mulf %60, %61 : vector<128x3xf32>
    %cst_39 = arith.constant -2.000000e-01 : f32
    %63 = vector.broadcast %cst_39 : f32 to vector<128x3xf32>
    %64 = arith.addf %62, %63 : vector<128x3xf32>
    %cst_40 = arith.constant 0.000000e+00 : f32
    %cst_41 = arith.constant 1.000000e+00 : f32
    %65 = vector.broadcast %cst_40 : f32 to vector<128x3xf32>
    %66 = arith.maximumf %65, %64 : vector<128x3xf32>
    %67 = vector.broadcast %cst_41 : f32 to vector<128x3xf32>
    %68 = arith.minimumf %67, %66 : vector<128x3xf32>
    %c0_42 = arith.constant 0 : index
    %c0_43 = arith.constant 0 : index
    %69 = vector.load %arg11[%c0_42, %c0_43] : memref<128x3xf32, #tpu.memory_space<vmem>>, vector<128x3xf32>
    tpu.vector_store %arg11[%c0_42, %c0_43], %68 {strides = array<i32>} : memref<128x3xf32, #tpu.memory_space<vmem>>, vector<128x3xf32>,
    %cst_44 = arith.constant -0.321887583 : f32
    %70 = vector.broadcast %cst_44 : f32 to vector<128x3xf32>
    %71 = arith.subf %70, %51 : vector<128x3xf32>
    %cst_45 = arith.constant 0.000000e+00 : f32
    %72 = vector.broadcast %cst_45 : f32 to vector<128x3xf32>
    %73 = arith.maximumf %71, %72 : vector<128x3xf32>
    %74 = vector.broadcast %cst_45 : f32 to vector<128x3xf32>
    %75 = arith.subf %71, %74 : vector<128x3xf32>
    %76 = arith.cmpf one, %75, %75 : vector<128x3xf32>
    %77 = vector.broadcast %cst_45 : f32 to vector<128x3xf32>
    %78 = arith.addf %71, %77 : vector<128x3xf32>
    %79 = math.absf %75 : vector<128x3xf32>
    %cst_46 = arith.constant 0.000000e+00 : f32
    %80 = vector.broadcast %cst_46 : f32 to vector<128x3xf32>
    %81 = arith.subf %80, %79 : vector<128x3xf32>
    %82 = math.exp %81 : vector<128x3xf32>
    %83 = math.log1p %82 : vector<128x3xf32>
    %84 = arith.addf %73, %83 : vector<128x3xf32>
    %85 = arith.select %76, %78, %84 : vector<128x3xi1>, vector<128x3xf32>
    %cst_47 = arith.constant 0.000000e+00 : f32
    %86 = vector.broadcast %cst_47 : f32 to vector<128x3xf32>
    %87 = arith.subf %86, %85 : vector<128x3xf32>
    %c0_48 = arith.constant 0 : index
    %c0_49 = arith.constant 0 : index
    %88 = vector.load %arg12[%c0_48, %c0_49] : memref<128x3xf32, #tpu.memory_space<vmem>>, vector<128x3xf32>
    tpu.vector_store %arg12[%c0_48, %c0_49], %87 {strides = array<i32>} : memref<128x3xf32, #tpu.memory_space<vmem>>, vector<128x3xf32>,
    %89 = vector.extract_strided_slice %68 {offsets = [0, 0], sizes = [128, 1], strides = [1, 1]} : vector<128x3xf32> to vector<128x1xf32>
    %90 = vector.broadcast %89 : vector<128x1xf32> to vector<128x32xf32>
    %91 = arith.mulf %0, %90 : vector<128x32xf32>
    %c0_50 = arith.constant 0 : index
    %c0_51 = arith.constant 0 : index
    %92 = vector.load %arg10[%c0_50, %c0_51] : memref<128x32xf32, #tpu.memory_space<vmem>>, vector<128x32xf32>
    tpu.vector_store %arg10[%c0_50, %c0_51], %91 {strides = array<i32>} : memref<128x32xf32, #tpu.memory_space<vmem>>, vector<128x32xf32>,
    return
  }
  func.func @transform_0(%arg0: i32) -> (i32, i32) {
    %c0_i32 = arith.constant 0 : i32
    %c0_i32_0 = arith.constant 0 : i32
    return %arg0, %c0_i32 : i32, i32
  }
  func.func @transform_1(%arg0: i32) -> (i32, i32) {
    %c0_i32 = arith.constant 0 : i32
    %c0_i32_0 = arith.constant 0 : i32
    return %arg0, %c0_i32 : i32, i32
  }
  func.func @transform_2(%arg0: i32) -> (i32, i32) {
    %c0_i32 = arith.constant 0 : i32
    %c0_i32_0 = arith.constant 0 : i32
    return %arg0, %c0_i32 : i32, i32
  }
  func.func @transform_3(%arg0: i32) -> (i32, i32, i32) {
    %c0_i32 = arith.constant 0 : i32
    %c0_i32_0 = arith.constant 0 : i32
    %c0_i32_1 = arith.constant 0 : i32
    %c0_i32_2 = arith.constant 0 : i32
    return %c0_i32, %c0_i32_0, %c0_i32_1 : i32, i32, i32
  }
  func.func @transform_4(%arg0: i32) -> (i32, i32) {
    %c0_i32 = arith.constant 0 : i32
    %c0_i32_0 = arith.constant 0 : i32
    %c0_i32_1 = arith.constant 0 : i32
    return %c0_i32, %c0_i32_0 : i32, i32
  }
  func.func @transform_5(%arg0: i32) -> (i32, i32) {
    %c0_i32 = arith.constant 0 : i32
    %c0_i32_0 = arith.constant 0 : i32
    %c0_i32_1 = arith.constant 0 : i32
    return %c0_i32, %c0_i32_0 : i32, i32
  }
  func.func @transform_6(%arg0: i32) -> (i32, i32) {
    %c0_i32 = arith.constant 0 : i32
    %c0_i32_0 = arith.constant 0 : i32
    %c0_i32_1 = arith.constant 0 : i32
    return %c0_i32, %c0_i32_0 : i32, i32
  }
  func.func @transform_7(%arg0: i32) -> (i32, i32) {
    %c0_i32 = arith.constant 0 : i32
    %c0_i32_0 = arith.constant 0 : i32
    %c0_i32_1 = arith.constant 0 : i32
    return %c0_i32, %c0_i32_0 : i32, i32
  }
  func.func @transform_8(%arg0: i32) -> (i32, i32) {
    %c0_i32 = arith.constant 0 : i32
    %c0_i32_0 = arith.constant 0 : i32
    return %arg0, %c0_i32 : i32, i32
  }
  func.func @transform_9(%arg0: i32) -> (i32, i32) {
    %c0_i32 = arith.constant 0 : i32
    %c0_i32_0 = arith.constant 0 : i32
    return %arg0, %c0_i32 : i32, i32
  }
  func.func @transform_10(%arg0: i32) -> (i32, i32) {
    %c0_i32 = arith.constant 0 : i32
    %c0_i32_0 = arith.constant 0 : i32
    return %arg0, %c0_i32 : i32, i32
  }
  func.func @transform_11(%arg0: i32) -> (i32, i32) {
    %c0_i32 = arith.constant 0 : i32
    %c0_i32_0 = arith.constant 0 : i32
    return %arg0, %c0_i32 : i32, i32
  }
}

</mosaic_0001>

<llo_original>
// kernel: tpu_custom_call.1
$region0: #{tpu_custom_call.1}
  #allocation0 [shape = 'u32[]', space=smem, size = 0x4, offset = 0x4, fixed_abs, tag = 'smem constant byte address 0x4 - core index']
  #allocation1 [shape = 'u32[144,128]{1,0:T(1,128)}', space=vmem, size = 0x12000, scoped, tag = 'internal scratch']
  %s0 = inlined_call_operand.vmem [shape: f32[128,32], index: 0, kind: input, shape index: {}]
  %s1 = inlined_call_operand.vmem [shape: f32[128,32], index: 1, kind: input, shape index: {}]
  %s2 = inlined_call_operand.vmem [shape: f32[128,32], index: 2, kind: input, shape index: {}]
  %s3 = inlined_call_operand.vmem [shape: bf16[3,32,16], index: 3, kind: input, shape index: {}]
  %s4 = inlined_call_operand.vmem [shape: f32[3,16], index: 4, kind: input, shape index: {}]
  %s5 = inlined_call_operand.vmem [shape: f32[3,16], index: 5, kind: input, shape index: {}]
  %s6 = inlined_call_operand.vmem [shape: f32[1,3], index: 6, kind: input, shape index: {}]
  %s7 = inlined_call_operand.vmem [shape: f32[1,3], index: 7, kind: input, shape index: {}]
  %s8 = inlined_call_operand.vmem [shape: f32[128,3], index: 8, kind: input, shape index: {}]
  %s9 = inlined_call_operand.vmem [shape: f32[128,32], index: 9, kind: output, shape index: {0}]
  %s10 = inlined_call_operand.vmem [shape: f32[128,3], index: 10, kind: output, shape index: {1}]
  %s11 = inlined_call_operand.vmem [shape: f32[128,3], index: 11, kind: output, shape index: {2}]
  %12 = xla_tuple %s9, %s10, %s11
  %s13 = sld [smem:[#allocation0]]
  $region62: #{tpu_custom_call.1} parent=0
    _
  %s15 = ssub.s32 1, %s13
  %s16 = scalar_select 0, %s15, %s13
  // Predicated region
  $region2: #{tpu_custom_call.1} parent=0 // pred_check
    _
  $region3: #{tpu_custom_call.1} parent=0 // pred_check_branch
    %18 = sbr.rel (0) target = $region5
  $region4: #{tpu_custom_call.1} parent=0 // pred_region
    _
  $region5: #{tpu_custom_call.1} parent=0 // pred_fallthru
    _
  // Predicated region
  $region6: #{tpu_custom_call.1} parent=0 // pred_check
    _
  $region7: #{tpu_custom_call.1} parent=0 // pred_check_branch
    %20 = sbr.rel (0) target = $region9
  $region8: #{tpu_custom_call.1} parent=0 // pred_region
    _
  $region9: #{tpu_custom_call.1} parent=0 // pred_fallthru
    _
  // Predicated region
  $region10: #{tpu_custom_call.1} parent=0 // pred_check
    _
  $region11: #{tpu_custom_call.1} parent=0 // pred_check_branch
    %22 = sbr.rel (0) target = $region13
  $region12: #{tpu_custom_call.1} parent=0 // pred_region
    _
  $region13: #{tpu_custom_call.1} parent=0 // pred_fallthru
    _
  // Predicated region
  $region14: #{tpu_custom_call.1} parent=0 // pred_check
    _
  $region15: #{tpu_custom_call.1} parent=0 // pred_check_branch
    %24 = sbr.rel (0) target = $region17
  $region16: #{tpu_custom_call.1} parent=0 // pred_region
    _
  $region17: #{tpu_custom_call.1} parent=0 // pred_fallthru
    _
  // Predicated region
  $region18: #{tpu_custom_call.1} parent=0 // pred_check
    _
  $region19: #{tpu_custom_call.1} parent=0 // pred_check_branch
    %26 = sbr.rel (0) target = $region21
  $region20: #{tpu_custom_call.1} parent=0 // pred_region
    _
  $region21: #{tpu_custom_call.1} parent=0 // pred_fallthru
    _
  // Predicated region
  $region22: #{tpu_custom_call.1} parent=0 // pred_check
    _
  $region23: #{tpu_custom_call.1} parent=0 // pred_check_branch
    %28 = sbr.rel (0) target = $region25
  $region24: #{tpu_custom_call.1} parent=0 // pred_region
    _
  $region25: #{tpu_custom_call.1} parent=0 // pred_fallthru
    _
  // Predicated region
  $region26: #{tpu_custom_call.1} parent=0 // pred_check
    _
  $region27: #{tpu_custom_call.1} parent=0 // pred_check_branch
    %30 = sbr.rel (0) target = $region29
  $region28: #{tpu_custom_call.1} parent=0 // pred_region
    _
  $region29: #{tpu_custom_call.1} parent=0 // pred_fallthru
    _
  // Predicated region
  $region30: #{tpu_custom_call.1} parent=0 // pred_check
    _
  $region31: #{tpu_custom_call.1} parent=0 // pred_check_branch
    %32 = sbr.rel (0) target = $region33
  $region32: #{tpu_custom_call.1} parent=0 // pred_region
    _
  $region33: #{tpu_custom_call.1} parent=0 // pred_fallthru
    _
  // Predicated region
  $region34: #{tpu_custom_call.1} parent=0 // pred_check
    _
  $region35: #{tpu_custom_call.1} parent=0 // pred_check_branch
    %34 = sbr.rel (0) target = $region37
  $region36: #{tpu_custom_call.1} parent=0 // pred_region
    _
  $region37: #{tpu_custom_call.1} parent=0 // pred_fallthru
    _
  %v36 = vld [vmem:[%s0] sm:$0xff]
  %v37 = vld [vmem:[%s0 + $0x8] sm:$0xff]
  %v38 = vld [vmem:[%s0 + $0x10] sm:$0xff]
  %v39 = vld [vmem:[%s0 + $0x18] sm:$0xff]
  %v40 = vld [vmem:[%s0 + $0x20] sm:$0xff]
  %v41 = vld [vmem:[%s0 + $0x28] sm:$0xff]
  %v42 = vld [vmem:[%s0 + $0x30] sm:$0xff]
  %v43 = vld [vmem:[%s0 + $0x38] sm:$0xff]
  %v44 = vld [vmem:[%s0 + $0x40] sm:$0xff]
  %v45 = vld [vmem:[%s0 + $0x48] sm:$0xff]
  %v46 = vld [vmem:[%s0 + $0x50] sm:$0xff]
  %v47 = vld [vmem:[%s0 + $0x58] sm:$0xff]
  %v48 = vld [vmem:[%s0 + $0x60] sm:$0xff]
  %v49 = vld [vmem:[%s0 + $0x68] sm:$0xff]
  %v50 = vld [vmem:[%s0 + $0x70] sm:$0xff]
  %v51 = vld [vmem:[%s0 + $0x78] sm:$0xff]
  %v52 = vpack.c.bf16 %v37, %v36
  %v53 = vpack.c.bf16 %v39, %v38
  %v54 = vpack.c.bf16 %v41, %v40
  %v55 = vpack.c.bf16 %v43, %v42
  %v56 = vpack.c.bf16 %v45, %v44
  %v57 = vpack.c.bf16 %v47, %v46
  %v58 = vpack.c.bf16 %v49, %v48
  %v59 = vpack.c.bf16 %v51, %v50
  %v60 = vld [vmem:[%s3] sm:$0xf]
  %v61 = vld [vmem:[%s3 + $0x4] sm:$0xf]
  %v62 = vld [vmem:[%s3 + $0x8] sm:$0xf]
  %v63 = vld [vmem:[%s3 + $0xc] sm:$0xf]
  %v64 = vld [vmem:[%s4] sm:$0x1]
  %v65 = vlaneseq
  %v66 = vshrl.u32 %v65, 7
  %v67 = vsub.s32 0, %v66
  %v68 = vrot.slane %v64, %v67
  %v73 = vunpack.c.l.b16 %v60
  %v74 = vunpack.c.l.b16 %v61
  %v75 = vunpack.c.l.b16 %v62
  %v76 = vunpack.c.l.b16 %v63
  %v77 = vpack.c.b16 %v74, %v73
  %v78 = vpack.c.b16 %v76, %v75
  %vm81 = vcmask 261120
  %v83 = vsel %vm81, %v52, 0
  %v86 = vsel %vm81, %v53, 0
  %v89 = vsel %vm81, %v54, 0
  %v92 = vsel %vm81, %v55, 0
  %v95 = vsel %vm81, %v56, 0
  %v98 = vsel %vm81, %v57, 0
  %v101 = vsel %vm81, %v58, 0
  %v104 = vsel %vm81, %v59, 0
  %106 = vmatprep.subr.bf16.mxu0 0
  %107 = vmatpush1.bf16.msra.mxu0 %v77
  %108 = vmatprep.subr.bf16.mxu0 0
  %109 = vmatpush1.bf16.msra.mxu0 %v78
  %110 = vmatprep.subr.bf16.mxu0 0
  %111 = vmatpush1.bf16.msra.mxu0 0
  %112 = vmatprep.subr.bf16.mxu0 0
  %113 = vmatpush1.bf16.msra.mxu0 0
  %114 = vmatprep.subr.bf16.mxu0 0
  %115 = vmatpush1.bf16.msra.mxu0 0
  %116 = vmatprep.subr.bf16.mxu0 0
  %117 = vmatpush1.bf16.msra.mxu0 0
  %118 = vmatprep.subr.bf16.mxu0 0
  %119 = vmatpush1.bf16.msra.mxu0 0
  %120 = vmatprep.subr.bf16.mxu0 0
  %121 = vmatpush1.bf16.msra.mxu0 0
  %122 = vmatprep.subr.bf16.mxu0 0
  %123 = vmatpush1.bf16.msra.mxu0 0
  %124 = vmatprep.subr.bf16.mxu0 0
  %125 = vmatpush1.bf16.msra.mxu0 0
  %126 = vmatprep.subr.bf16.mxu0 0
  %127 = vmatpush1.bf16.msra.mxu0 0
  %128 = vmatprep.subr.bf16.mxu0 0
  %129 = vmatpush1.bf16.msra.mxu0 0
  %130 = vmatprep.subr.bf16.mxu0 0
  %131 = vmatpush1.bf16.msra.mxu0 0
  %132 = vmatprep.subr.bf16.mxu0 0
  %133 = vmatpush1.bf16.msra.mxu0 0
  %134 = vmatprep.subr.bf16.mxu0 0
  %135 = vmatpush1.bf16.msra.mxu0 0
  %136 = vmatprep.subr.bf16.mxu0 0
  %137 = vmatpush1.bf16.msra.mxu0 0
  %138 = vmatprep.mubr.bf16.mxu0 0
  %139 = vmatmul.mubr.bf16.gmra.mrb[0].mxu0 %v83
  %v140 = vpop.f32.mrb[0].mxu0
  %v141 = vadd.f32 %v68, %v140
  %v142 = vpop.f32.mrb[0].mxu0
  %v143 = vpop.f32.mrb[0].mxu0
  %v144 = vadd.f32 %v68, %v143
  %v145 = vpop.f32.mrb[0].mxu0
  %146 = vmatprep.mubr.bf16.mxu0 0
  %147 = vmatmul.mubr.bf16.gmra.mrb[0].mxu0 %v86
  %v148 = vpop.f32.mrb[0].mxu0
  %v149 = vadd.f32 %v68, %v148
  %v150 = vpop.f32.mrb[0].mxu0
  %v151 = vpop.f32.mrb[0].mxu0
  %v152 = vadd.f32 %v68, %v151
  %v153 = vpop.f32.mrb[0].mxu0
  %154 = vmatprep.mubr.bf16.mxu0 0
  %155 = vmatmul.mubr.bf16.gmra.mrb[0].mxu0 %v89
  %v156 = vpop.f32.mrb[0].mxu0
  %v157 = vadd.f32 %v68, %v156
  %v158 = vpop.f32.mrb[0].mxu0
  %v159 = vpop.f32.mrb[0].mxu0
  %v160 = vadd.f32 %v68, %v159
  %v161 = vpop.f32.mrb[0].mxu0
  %162 = vmatprep.mubr.bf16.mxu0 0
  %163 = vmatmul.mubr.bf16.gmra.mrb[0].mxu0 %v92
  %v164 = vpop.f32.mrb[0].mxu0
  %v165 = vadd.f32 %v68, %v164
  %v166 = vpop.f32.mrb[0].mxu0
  %v167 = vpop.f32.mrb[0].mxu0
  %v168 = vadd.f32 %v68, %v167
  %v169 = vpop.f32.mrb[0].mxu0
  %170 = vmatprep.mubr.bf16.mxu0 0
  %171 = vmatmul.mubr.bf16.gmra.mrb[0].mxu0 %v95
  %v172 = vpop.f32.mrb[0].mxu0
  %v173 = vadd.f32 %v68, %v172
  %v174 = vpop.f32.mrb[0].mxu0
  %v175 = vpop.f32.mrb[0].mxu0
  %v176 = vadd.f32 %v68, %v175
  %v177 = vpop.f32.mrb[0].mxu0
  %178 = vmatprep.mubr.bf16.mxu0 0
  %179 = vmatmul.mubr.bf16.gmra.mrb[0].mxu0 %v98
  %v180 = vpop.f32.mrb[0].mxu0
  %v181 = vadd.f32 %v68, %v180
  %v182 = vpop.f32.mrb[0].mxu0
  %v183 = vpop.f32.mrb[0].mxu0
  %v184 = vadd.f32 %v68, %v183
  %v185 = vpop.f32.mrb[0].mxu0
  %186 = vmatprep.mubr.bf16.mxu0 0
  %187 = vmatmul.mubr.bf16.gmra.mrb[0].mxu0 %v101
  %v188 = vpop.f32.mrb[0].mxu0
  %v189 = vadd.f32 %v68, %v188
  %v190 = vpop.f32.mrb[0].mxu0
  %v191 = vpop.f32.mrb[0].mxu0
  %v192 = vadd.f32 %v68, %v191
  %v193 = vpop.f32.mrb[0].mxu0
  %194 = vmatprep.mubr.bf16.mxu0 0
  %195 = vmatmul.mubr.bf16.gmra.mrb[0].mxu0 %v104
  %v196 = vpop.f32.mrb[0].mxu0
  %v197 = vadd.f32 %v68, %v196
  %v198 = vpop.f32.mrb[0].mxu0
  %v199 = vpop.f32.mrb[0].mxu0
  %v200 = vadd.f32 %v68, %v199
  %v201 = vpop.f32.mrb[0].mxu0
  %202 = vdwg.mxu0
  %v203 = vtanh.pop %v141
  %v204 = vtanh.pop %v144
  %v205 = vtanh.pop %v149
  %v206 = vtanh.pop %v152
  %v207 = vtanh.pop %v157
  %v208 = vtanh.pop %v160
  %v209 = vtanh.pop %v165
  %v210 = vtanh.pop %v168
  %v211 = vtanh.pop %v173
  %v212 = vtanh.pop %v176
  %v213 = vtanh.pop %v181
  %v214 = vtanh.pop %v184
  %v215 = vtanh.pop %v189
  %v216 = vtanh.pop %v192
  %v217 = vtanh.pop %v197
  %v218 = vtanh.pop %v200
  %v219 = vld [vmem:[%s5] sm:$0x1]
  %v220 = vlaneseq
  %v221 = vshrl.u32 %v220, 7
  %v222 = vsub.s32 0, %v221
  %v223 = vrot.slane %v219, %v222
  %v224 = vmul.f32 %v203, %v223
  %v225 = vmul.f32 %v204, %v223
  %v226 = vmul.f32 %v205, %v223
  %v227 = vmul.f32 %v206, %v223
  %v228 = vmul.f32 %v207, %v223
  %v229 = vmul.f32 %v208, %v223
  %v230 = vmul.f32 %v209, %v223
  %v231 = vmul.f32 %v210, %v223
  %v232 = vmul.f32 %v211, %v223
  %v233 = vmul.f32 %v212, %v223
  %v234 = vmul.f32 %v213, %v223
  %v235 = vmul.f32 %v214, %v223
  %v236 = vmul.f32 %v215, %v223
  %v237 = vmul.f32 %v216, %v223
  %v238 = vmul.f32 %v217, %v223
  %v239 = vmul.f32 %v218, %v223
  %vm240 = vcmask 130048
  %v241 = vsel %vm240, %v224, 0.0
  %242 = vadd.xlane.f32.xlu0 %v241
  %v243 = vpop.xlane.xlu0 %242
  %v244 = vsel %vm240, %v225, 0.0
  %245 = vadd.xlane.f32.xlu0 %v244
  %v246 = vpop.xlane.xlu0 %245
  %v247 = vsel %vm240, %v226, 0.0
  %248 = vadd.xlane.f32.xlu0 %v247
  %v249 = vpop.xlane.xlu0 %248
  %v250 = vsel %vm240, %v227, 0.0
  %251 = vadd.xlane.f32.xlu0 %v250
  %v252 = vpop.xlane.xlu0 %251
  %v253 = vsel %vm240, %v228, 0.0
  %254 = vadd.xlane.f32.xlu0 %v253
  %v255 = vpop.xlane.xlu0 %254
  %v256 = vsel %vm240, %v229, 0.0
  %257 = vadd.xlane.f32.xlu0 %v256
  %v258 = vpop.xlane.xlu0 %257
  %v259 = vsel %vm240, %v230, 0.0
  %260 = vadd.xlane.f32.xlu0 %v259
  %v261 = vpop.xlane.xlu0 %260
  %v262 = vsel %vm240, %v231, 0.0
  %263 = vadd.xlane.f32.xlu0 %v262
  %v264 = vpop.xlane.xlu0 %263
  %v265 = vsel %vm240, %v232, 0.0
  %266 = vadd.xlane.f32.xlu0 %v265
  %v267 = vpop.xlane.xlu0 %266
  %v268 = vsel %vm240, %v233, 0.0
  %269 = vadd.xlane.f32.xlu0 %v268
  %v270 = vpop.xlane.xlu0 %269
  %v271 = vsel %vm240, %v234, 0.0
  %272 = vadd.xlane.f32.xlu0 %v271
  %v273 = vpop.xlane.xlu0 %272
  %v274 = vsel %vm240, %v235, 0.0
  %275 = vadd.xlane.f32.xlu0 %v274
  %v276 = vpop.xlane.xlu0 %275
  %v277 = vsel %vm240, %v236, 0.0
  %278 = vadd.xlane.f32.xlu0 %v277
  %v279 = vpop.xlane.xlu0 %278
  %v280 = vsel %vm240, %v237, 0.0
  %281 = vadd.xlane.f32.xlu0 %v280
  %v282 = vpop.xlane.xlu0 %281
  %v283 = vsel %vm240, %v238, 0.0
  %284 = vadd.xlane.f32.xlu0 %v283
  %v285 = vpop.xlane.xlu0 %284
  %v286 = vsel %vm240, %v239, 0.0
  %287 = vadd.xlane.f32.xlu0 %v286
  %v288 = vpop.xlane.xlu0 %287
  %v289 = vld [vmem:[%s1] sm:$0xff]
  %v290 = vld [vmem:[%s1 + $0x8] sm:$0xff]
  %v291 = vld [vmem:[%s1 + $0x10] sm:$0xff]
  %v292 = vld [vmem:[%s1 + $0x18] sm:$0xff]
  %v293 = vld [vmem:[%s1 + $0x20] sm:$0xff]
  %v294 = vld [vmem:[%s1 + $0x28] sm:$0xff]
  %v295 = vld [vmem:[%s1 + $0x30] sm:$0xff]
  %v296 = vld [vmem:[%s1 + $0x38] sm:$0xff]
  %v297 = vld [vmem:[%s1 + $0x40] sm:$0xff]
  %v298 = vld [vmem:[%s1 + $0x48] sm:$0xff]
  %v299 = vld [vmem:[%s1 + $0x50] sm:$0xff]
  %v300 = vld [vmem:[%s1 + $0x58] sm:$0xff]
  %v301 = vld [vmem:[%s1 + $0x60] sm:$0xff]
  %v302 = vld [vmem:[%s1 + $0x68] sm:$0xff]
  %v303 = vld [vmem:[%s1 + $0x70] sm:$0xff]
  %v304 = vld [vmem:[%s1 + $0x78] sm:$0xff]
  %v305 = vpack.c.bf16 %v290, %v289
  %v306 = vpack.c.bf16 %v292, %v291
  %v307 = vpack.c.bf16 %v294, %v293
  %v308 = vpack.c.bf16 %v296, %v295
  %v309 = vpack.c.bf16 %v298, %v297
  %v310 = vpack.c.bf16 %v300, %v299
  %v311 = vpack.c.bf16 %v302, %v301
  %v312 = vpack.c.bf16 %v304, %v303
  %s313 = scalar_lea.vmem %s3, 16
  %v314 = vld [vmem:[%s313] sm:$0xf]
  %v315 = vld [vmem:[%s313 + $0x4] sm:$0xf]
  %v316 = vld [vmem:[%s313 + $0x8] sm:$0xf]
  %v317 = vld [vmem:[%s313 + $0xc] sm:$0xf]
  %v318 = vld [vmem:[%s4 + $0x1] sm:$0x1]
  %v319 = vlaneseq
  %v320 = vshrl.u32 %v319, 7
  %v321 = vsub.s32 0, %v320
  %v322 = vrot.slane %v318, %v321
  %v327 = vunpack.c.l.b16 %v314
  %v328 = vunpack.c.l.b16 %v315
  %v329 = vunpack.c.l.b16 %v316
  %v330 = vunpack.c.l.b16 %v317
  %v331 = vpack.c.b16 %v328, %v327
  %v332 = vpack.c.b16 %v330, %v329
  %v336 = vsel %vm81, %v305, 0
  %v339 = vsel %vm81, %v306, 0
  %v342 = vsel %vm81, %v307, 0
  %v345 = vsel %vm81, %v308, 0
  %v348 = vsel %vm81, %v309, 0
  %v351 = vsel %vm81, %v310, 0
  %v354 = vsel %vm81, %v311, 0
  %v357 = vsel %vm81, %v312, 0
  %359 = vmatprep.subr.bf16.mxu0 0
  %360 = vmatpush1.bf16.msra.mxu0 %v331
  %361 = vmatprep.subr.bf16.mxu0 0
  %362 = vmatpush1.bf16.msra.mxu0 %v332
  %363 = vmatprep.subr.bf16.mxu0 0
  %364 = vmatpush1.bf16.msra.mxu0 0
  %365 = vmatprep.subr.bf16.mxu0 0
  %366 = vmatpush1.bf16.msra.mxu0 0
  %367 = vmatprep.subr.bf16.mxu0 0
  %368 = vmatpush1.bf16.msra.mxu0 0
  %369 = vmatprep.subr.bf16.mxu0 0
  %370 = vmatpush1.bf16.msra.mxu0 0
  %371 = vmatprep.subr.bf16.mxu0 0
  %372 = vmatpush1.bf16.msra.mxu0 0
  %373 = vmatprep.subr.bf16.mxu0 0
  %374 = vmatpush1.bf16.msra.mxu0 0
  %375 = vmatprep.subr.bf16.mxu0 0
  %376 = vmatpush1.bf16.msra.mxu0 0
  %377 = vmatprep.subr.bf16.mxu0 0
  %378 = vmatpush1.bf16.msra.mxu0 0
  %379 = vmatprep.subr.bf16.mxu0 0
  %380 = vmatpush1.bf16.msra.mxu0 0
  %381 = vmatprep.subr.bf16.mxu0 0
  %382 = vmatpush1.bf16.msra.mxu0 0
  %383 = vmatprep.subr.bf16.mxu0 0
  %384 = vmatpush1.bf16.msra.mxu0 0
  %385 = vmatprep.subr.bf16.mxu0 0
  %386 = vmatpush1.bf16.msra.mxu0 0
  %387 = vmatprep.subr.bf16.mxu0 0
  %388 = vmatpush1.bf16.msra.mxu0 0
  %389 = vmatprep.subr.bf16.mxu0 0
  %390 = vmatpush1.bf16.msra.mxu0 0
  %391 = vmatprep.mubr.bf16.mxu0 0
  %392 = vmatmul.mubr.bf16.gmra.mrb[0].mxu0 %v336
  %v393 = vpop.f32.mrb[0].mxu0
  %v394 = vadd.f32 %v322, %v393
  %v395 = vpop.f32.mrb[0].mxu0
  %v396 = vpop.f32.mrb[0].mxu0
  %v397 = vadd.f32 %v322, %v396
  %v398 = vpop.f32.mrb[0].mxu0
  %399 = vmatprep.mubr.bf16.mxu0 0
  %400 = vmatmul.mubr.bf16.gmra.mrb[0].mxu0 %v339
  %v401 = vpop.f32.mrb[0].mxu0
  %v402 = vadd.f32 %v322, %v401
  %v403 = vpop.f32.mrb[0].mxu0
  %v404 = vpop.f32.mrb[0].mxu0
  %v405 = vadd.f32 %v322, %v404
  %v406 = vpop.f32.mrb[0].mxu0
  %407 = vmatprep.mubr.bf16.mxu0 0
  %408 = vmatmul.mubr.bf16.gmra.mrb[0].mxu0 %v342
  %v409 = vpop.f32.mrb[0].mxu0
  %v410 = vadd.f32 %v322, %v409
  %v411 = vpop.f32.mrb[0].mxu0
  %v412 = vpop.f32.mrb[0].mxu0
  %v413 = vadd.f32 %v322, %v412
  %v414 = vpop.f32.mrb[0].mxu0
  %415 = vmatprep.mubr.bf16.mxu0 0
  %416 = vmatmul.mubr.bf16.gmra.mrb[0].mxu0 %v345
  %v417 = vpop.f32.mrb[0].mxu0
  %v418 = vadd.f32 %v322, %v417
  %v419 = vpop.f32.mrb[0].mxu0
  %v420 = vpop.f32.mrb[0].mxu0
  %v421 = vadd.f32 %v322, %v420
  %v422 = vpop.f32.mrb[0].mxu0
  %423 = vmatprep.mubr.bf16.mxu0 0
  %424 = vmatmul.mubr.bf16.gmra.mrb[0].mxu0 %v348
  %v425 = vpop.f32.mrb[0].mxu0
  %v426 = vadd.f32 %v322, %v425
  %v427 = vpop.f32.mrb[0].mxu0
  %v428 = vpop.f32.mrb[0].mxu0
  %v429 = vadd.f32 %v322, %v428
  %v430 = vpop.f32.mrb[0].mxu0
  %431 = vmatprep.mubr.bf16.mxu0 0
  %432 = vmatmul.mubr.bf16.gmra.mrb[0].mxu0 %v351
  %v433 = vpop.f32.mrb[0].mxu0
  %v434 = vadd.f32 %v322, %v433
  %v435 = vpop.f32.mrb[0].mxu0
  %v436 = vpop.f32.mrb[0].mxu0
  %v437 = vadd.f32 %v322, %v436
  %v438 = vpop.f32.mrb[0].mxu0
  %439 = vmatprep.mubr.bf16.mxu0 0
  %440 = vmatmul.mubr.bf16.gmra.mrb[0].mxu0 %v354
  %v441 = vpop.f32.mrb[0].mxu0
  %v442 = vadd.f32 %v322, %v441
  %v443 = vpop.f32.mrb[0].mxu0
  %v444 = vpop.f32.mrb[0].mxu0
  %v445 = vadd.f32 %v322, %v444
  %v446 = vpop.f32.mrb[0].mxu0
  %447 = vmatprep.mubr.bf16.mxu0 0
  %448 = vmatmul.mubr.bf16.gmra.mrb[0].mxu0 %v357
  %v449 = vpop.f32.mrb[0].mxu0
  %v450 = vadd.f32 %v322, %v449
  %v451 = vpop.f32.mrb[0].mxu0
  %v452 = vpop.f32.mrb[0].mxu0
  %v453 = vadd.f32 %v322, %v452
  %v454 = vpop.f32.mrb[0].mxu0
  %455 = vdwg.mxu0
  %v456 = vtanh.pop %v394
  %v457 = vtanh.pop %v397
  %v458 = vtanh.pop %v402
  %v459 = vtanh.pop %v405
  %v460 = vtanh.pop %v410
  %v461 = vtanh.pop %v413
  %v462 = vtanh.pop %v418
  %v463 = vtanh.pop %v421
  %v464 = vtanh.pop %v426
  %v465 = vtanh.pop %v429
  %v466 = vtanh.pop %v434
  %v467 = vtanh.pop %v437
  %v468 = vtanh.pop %v442
  %v469 = vtanh.pop %v445
  %v470 = vtanh.pop %v450
  %v471 = vtanh.pop %v453
  %v472 = vld [vmem:[%s5 + $0x1] sm:$0x1]
  %v473 = vlaneseq
  %v474 = vshrl.u32 %v473, 7
  %v475 = vsub.s32 0, %v474
  %v476 = vrot.slane %v472, %v475
  %v477 = vmul.f32 %v456, %v476
  %v478 = vmul.f32 %v457, %v476
  %v479 = vmul.f32 %v458, %v476
  %v480 = vmul.f32 %v459, %v476
  %v481 = vmul.f32 %v460, %v476
  %v482 = vmul.f32 %v461, %v476
  %v483 = vmul.f32 %v462, %v476
  %v484 = vmul.f32 %v463, %v476
  %v485 = vmul.f32 %v464, %v476
  %v486 = vmul.f32 %v465, %v476
  %v487 = vmul.f32 %v466, %v476
  %v488 = vmul.f32 %v467, %v476
  %v489 = vmul.f32 %v468, %v476
  %v490 = vmul.f32 %v469, %v476
  %v491 = vmul.f32 %v470, %v476
  %v492 = vmul.f32 %v471, %v476
  %v493 = vsel %vm240, %v477, 0.0
  %494 = vadd.xlane.f32.xlu0 %v493
  %v495 = vpop.xlane.xlu0 %494
  %v496 = vsel %vm240, %v478, 0.0
  %497 = vadd.xlane.f32.xlu0 %v496
  %v498 = vpop.xlane.xlu0 %497
  %v499 = vsel %vm240, %v479, 0.0
  %500 = vadd.xlane.f32.xlu0 %v499
  %v501 = vpop.xlane.xlu0 %500
  %v502 = vsel %vm240, %v480, 0.0
  %503 = vadd.xlane.f32.xlu0 %v502
  %v504 = vpop.xlane.xlu0 %503
  %v505 = vsel %vm240, %v481, 0.0
  %506 = vadd.xlane.f32.xlu0 %v505
  %v507 = vpop.xlane.xlu0 %506
  %v508 = vsel %vm240, %v482, 0.0
  %509 = vadd.xlane.f32.xlu0 %v508
  %v510 = vpop.xlane.xlu0 %509
  %v511 = vsel %vm240, %v483, 0.0
  %512 = vadd.xlane.f32.xlu0 %v511
  %v513 = vpop.xlane.xlu0 %512
  %v514 = vsel %vm240, %v484, 0.0
  %515 = vadd.xlane.f32.xlu0 %v514
  %v516 = vpop.xlane.xlu0 %515
  %v517 = vsel %vm240, %v485, 0.0
  %518 = vadd.xlane.f32.xlu0 %v517
  %v519 = vpop.xlane.xlu0 %518
  %v520 = vsel %vm240, %v486, 0.0
  %521 = vadd.xlane.f32.xlu0 %v520
  %v522 = vpop.xlane.xlu0 %521
  %v523 = vsel %vm240, %v487, 0.0
  %524 = vadd.xlane.f32.xlu0 %v523
  %v525 = vpop.xlane.xlu0 %524
  %v526 = vsel %vm240, %v488, 0.0
  %527 = vadd.xlane.f32.xlu0 %v526
  %v528 = vpop.xlane.xlu0 %527
  %v529 = vsel %vm240, %v489, 0.0
  %530 = vadd.xlane.f32.xlu0 %v529
  %v531 = vpop.xlane.xlu0 %530
  %v532 = vsel %vm240, %v490, 0.0
  %533 = vadd.xlane.f32.xlu0 %v532
  %v534 = vpop.xlane.xlu0 %533
  %v535 = vsel %vm240, %v491, 0.0
  %536 = vadd.xlane.f32.xlu0 %v535
  %v537 = vpop.xlane.xlu0 %536
  %v538 = vsel %vm240, %v492, 0.0
  %539 = vadd.xlane.f32.xlu0 %v538
  %v540 = vpop.xlane.xlu0 %539
  %v541 = vld [vmem:[%s2] sm:$0xff]
  %v542 = vld [vmem:[%s2 + $0x8] sm:$0xff]
  %v543 = vld [vmem:[%s2 + $0x10] sm:$0xff]
  %v544 = vld [vmem:[%s2 + $0x18] sm:$0xff]
  %v545 = vld [vmem:[%s2 + $0x20] sm:$0xff]
  %v546 = vld [vmem:[%s2 + $0x28] sm:$0xff]
  %v547 = vld [vmem:[%s2 + $0x30] sm:$0xff]
  %v548 = vld [vmem:[%s2 + $0x38] sm:$0xff]
  %v549 = vld [vmem:[%s2 + $0x40] sm:$0xff]
  %v550 = vld [vmem:[%s2 + $0x48] sm:$0xff]
  %v551 = vld [vmem:[%s2 + $0x50] sm:$0xff]
  %v552 = vld [vmem:[%s2 + $0x58] sm:$0xff]
  %v553 = vld [vmem:[%s2 + $0x60] sm:$0xff]
  %v554 = vld [vmem:[%s2 + $0x68] sm:$0xff]
  %v555 = vld [vmem:[%s2 + $0x70] sm:$0xff]
  %v556 = vld [vmem:[%s2 + $0x78] sm:$0xff]
  %v557 = vpack.c.bf16 %v542, %v541
  %v558 = vpack.c.bf16 %v544, %v543
  %v559 = vpack.c.bf16 %v546, %v545
  %v560 = vpack.c.bf16 %v548, %v547
  %v561 = vpack.c.bf16 %v550, %v549
  %v562 = vpack.c.bf16 %v552, %v551
  %v563 = vpack.c.bf16 %v554, %v553
  %v564 = vpack.c.bf16 %v556, %v555
  %s565 = scalar_lea.vmem %s3, 32
  %v566 = vld [vmem:[%s565] sm:$0xf]
  %v567 = vld [vmem:[%s565 + $0x4] sm:$0xf]
  %v568 = vld [vmem:[%s565 + $0x8] sm:$0xf]
  %v569 = vld [vmem:[%s565 + $0xc] sm:$0xf]
  %v570 = vld [vmem:[%s4 + $0x2] sm:$0x1]
  %v571 = vlaneseq
  %v572 = vshrl.u32 %v571, 7
  %v573 = vsub.s32 0, %v572
  %v574 = vrot.slane %v570, %v573
  %v579 = vunpack.c.l.b16 %v566
  %v580 = vunpack.c.l.b16 %v567
  %v581 = vunpack.c.l.b16 %v568
  %v582 = vunpack.c.l.b16 %v569
  %v583 = vpack.c.b16 %v580, %v579
  %v584 = vpack.c.b16 %v582, %v581
  %v588 = vsel %vm81, %v557, 0
  %v591 = vsel %vm81, %v558, 0
  %v594 = vsel %vm81, %v559, 0
  %v597 = vsel %vm81, %v560, 0
  %v600 = vsel %vm81, %v561, 0
  %v603 = vsel %vm81, %v562, 0
  %v606 = vsel %vm81, %v563, 0
  %v609 = vsel %vm81, %v564, 0
  %611 = vmatprep.subr.bf16.mxu0 0
  %612 = vmatpush1.bf16.msra.mxu0 %v583
  %613 = vmatprep.subr.bf16.mxu0 0
  %614 = vmatpush1.bf16.msra.mxu0 %v584
  %615 = vmatprep.subr.bf16.mxu0 0
  %616 = vmatpush1.bf16.msra.mxu0 0
  %617 = vmatprep.subr.bf16.mxu0 0
  %618 = vmatpush1.bf16.msra.mxu0 0
  %619 = vmatprep.subr.bf16.mxu0 0
  %620 = vmatpush1.bf16.msra.mxu0 0
  %621 = vmatprep.subr.bf16.mxu0 0
  %622 = vmatpush1.bf16.msra.mxu0 0
  %623 = vmatprep.subr.bf16.mxu0 0
  %624 = vmatpush1.bf16.msra.mxu0 0
  %625 = vmatprep.subr.bf16.mxu0 0
  %626 = vmatpush1.bf16.msra.mxu0 0
  %627 = vmatprep.subr.bf16.mxu0 0
  %628 = vmatpush1.bf16.msra.mxu0 0
  %629 = vmatprep.subr.bf16.mxu0 0
  %630 = vmatpush1.bf16.msra.mxu0 0
  %631 = vmatprep.subr.bf16.mxu0 0
  %632 = vmatpush1.bf16.msra.mxu0 0
  %633 = vmatprep.subr.bf16.mxu0 0
  %634 = vmatpush1.bf16.msra.mxu0 0
  %635 = vmatprep.subr.bf16.mxu0 0
  %636 = vmatpush1.bf16.msra.mxu0 0
  %637 = vmatprep.subr.bf16.mxu0 0
  %638 = vmatpush1.bf16.msra.mxu0 0
  %639 = vmatprep.subr.bf16.mxu0 0
  %640 = vmatpush1.bf16.msra.mxu0 0
  %641 = vmatprep.subr.bf16.mxu0 0
  %642 = vmatpush1.bf16.msra.mxu0 0
  %643 = vmatprep.mubr.bf16.mxu0 0
  %644 = vmatmul.mubr.bf16.gmra.mrb[0].mxu0 %v588
  %v645 = vpop.f32.mrb[0].mxu0
  %v646 = vadd.f32 %v574, %v645
  %v647 = vpop.f32.mrb[0].mxu0
  %v648 = vpop.f32.mrb[0].mxu0
  %v649 = vadd.f32 %v574, %v648
  %v650 = vpop.f32.mrb[0].mxu0
  %651 = vmatprep.mubr.bf16.mxu0 0
  %652 = vmatmul.mubr.bf16.gmra.mrb[0].mxu0 %v591
  %v653 = vpop.f32.mrb[0].mxu0
  %v654 = vadd.f32 %v574, %v653
  %v655 = vpop.f32.mrb[0].mxu0
  %v656 = vpop.f32.mrb[0].mxu0
  %v657 = vadd.f32 %v574, %v656
  %v658 = vpop.f32.mrb[0].mxu0
  %659 = vmatprep.mubr.bf16.mxu0 0
  %660 = vmatmul.mubr.bf16.gmra.mrb[0].mxu0 %v594
  %v661 = vpop.f32.mrb[0].mxu0
  %v662 = vadd.f32 %v574, %v661
  %v663 = vpop.f32.mrb[0].mxu0
  %v664 = vpop.f32.mrb[0].mxu0
  %v665 = vadd.f32 %v574, %v664
  %v666 = vpop.f32.mrb[0].mxu0
  %667 = vmatprep.mubr.bf16.mxu0 0
  %668 = vmatmul.mubr.bf16.gmra.mrb[0].mxu0 %v597
  %v669 = vpop.f32.mrb[0].mxu0
  %v670 = vadd.f32 %v574, %v669
  %v671 = vpop.f32.mrb[0].mxu0
  %v672 = vpop.f32.mrb[0].mxu0
  %v673 = vadd.f32 %v574, %v672
  %v674 = vpop.f32.mrb[0].mxu0
  %675 = vmatprep.mubr.bf16.mxu0 0
  %676 = vmatmul.mubr.bf16.gmra.mrb[0].mxu0 %v600
  %v677 = vpop.f32.mrb[0].mxu0
  %v678 = vadd.f32 %v574, %v677
  %v679 = vpop.f32.mrb[0].mxu0
  %v680 = vpop.f32.mrb[0].mxu0
  %v681 = vadd.f32 %v574, %v680
  %v682 = vpop.f32.mrb[0].mxu0
  %683 = vmatprep.mubr.bf16.mxu0 0
  %684 = vmatmul.mubr.bf16.gmra.mrb[0].mxu0 %v603
  %v685 = vpop.f32.mrb[0].mxu0
  %v686 = vadd.f32 %v574, %v685
  %v687 = vpop.f32.mrb[0].mxu0
  %v688 = vpop.f32.mrb[0].mxu0
  %v689 = vadd.f32 %v574, %v688
  %v690 = vpop.f32.mrb[0].mxu0
  %691 = vmatprep.mubr.bf16.mxu0 0
  %692 = vmatmul.mubr.bf16.gmra.mrb[0].mxu0 %v606
  %v693 = vpop.f32.mrb[0].mxu0
  %v694 = vadd.f32 %v574, %v693
  %v695 = vpop.f32.mrb[0].mxu0
  %v696 = vpop.f32.mrb[0].mxu0
  %v697 = vadd.f32 %v574, %v696
  %v698 = vpop.f32.mrb[0].mxu0
  %699 = vmatprep.mubr.bf16.mxu0 0
  %700 = vmatmul.mubr.bf16.gmra.mrb[0].mxu0 %v609
  %v701 = vpop.f32.mrb[0].mxu0
  %v702 = vadd.f32 %v574, %v701
  %v703 = vpop.f32.mrb[0].mxu0
  %v704 = vpop.f32.mrb[0].mxu0
  %v705 = vadd.f32 %v574, %v704
  %v706 = vpop.f32.mrb[0].mxu0
  %707 = vdwg.mxu0
  %v708 = vtanh.pop %v646
  %v709 = vtanh.pop %v649
  %v710 = vtanh.pop %v654
  %v711 = vtanh.pop %v657
  %v712 = vtanh.pop %v662
  %v713 = vtanh.pop %v665
  %v714 = vtanh.pop %v670
  %v715 = vtanh.pop %v673
  %v716 = vtanh.pop %v678
  %v717 = vtanh.pop %v681
  %v718 = vtanh.pop %v686
  %v719 = vtanh.pop %v689
  %v720 = vtanh.pop %v694
  %v721 = vtanh.pop %v697
  %v722 = vtanh.pop %v702
  %v723 = vtanh.pop %v705
  %v724 = vld [vmem:[%s5 + $0x2] sm:$0x1]
  %v725 = vlaneseq
  %v726 = vshrl.u32 %v725, 7
  %v727 = vsub.s32 0, %v726
  %v728 = vrot.slane %v724, %v727
  %v729 = vmul.f32 %v708, %v728
  %v730 = vmul.f32 %v709, %v728
  %v731 = vmul.f32 %v710, %v728
  %v732 = vmul.f32 %v711, %v728
  %v733 = vmul.f32 %v712, %v728
  %v734 = vmul.f32 %v713, %v728
  %v735 = vmul.f32 %v714, %v728
  %v736 = vmul.f32 %v715, %v728
  %v737 = vmul.f32 %v716, %v728
  %v738 = vmul.f32 %v717, %v728
  %v739 = vmul.f32 %v718, %v728
  %v740 = vmul.f32 %v719, %v728
  %v741 = vmul.f32 %v720, %v728
  %v742 = vmul.f32 %v721, %v728
  %v743 = vmul.f32 %v722, %v728
  %v744 = vmul.f32 %v723, %v728
  %v745 = vsel %vm240, %v729, 0.0
  %746 = vadd.xlane.f32.xlu0 %v745
  %v747 = vpop.xlane.xlu0 %746
  %v748 = vsel %vm240, %v730, 0.0
  %749 = vadd.xlane.f32.xlu0 %v748
  %v750 = vpop.xlane.xlu0 %749
  %v751 = vsel %vm240, %v731, 0.0
  %752 = vadd.xlane.f32.xlu0 %v751
  %v753 = vpop.xlane.xlu0 %752
  %v754 = vsel %vm240, %v732, 0.0
  %755 = vadd.xlane.f32.xlu0 %v754
  %v756 = vpop.xlane.xlu0 %755
  %v757 = vsel %vm240, %v733, 0.0
  %758 = vadd.xlane.f32.xlu0 %v757
  %v759 = vpop.xlane.xlu0 %758
  %v760 = vsel %vm240, %v734, 0.0
  %761 = vadd.xlane.f32.xlu0 %v760
  %v762 = vpop.xlane.xlu0 %761
  %v763 = vsel %vm240, %v735, 0.0
  %764 = vadd.xlane.f32.xlu0 %v763
  %v765 = vpop.xlane.xlu0 %764
  %v766 = vsel %vm240, %v736, 0.0
  %767 = vadd.xlane.f32.xlu0 %v766
  %v768 = vpop.xlane.xlu0 %767
  %v769 = vsel %vm240, %v737, 0.0
  %770 = vadd.xlane.f32.xlu0 %v769
  %v771 = vpop.xlane.xlu0 %770
  %v772 = vsel %vm240, %v738, 0.0
  %773 = vadd.xlane.f32.xlu0 %v772
  %v774 = vpop.xlane.xlu0 %773
  %v775 = vsel %vm240, %v739, 0.0
  %776 = vadd.xlane.f32.xlu0 %v775
  %v777 = vpop.xlane.xlu0 %776
  %v778 = vsel %vm240, %v740, 0.0
  %779 = vadd.xlane.f32.xlu0 %v778
  %v780 = vpop.xlane.xlu0 %779
  %v781 = vsel %vm240, %v741, 0.0
  %782 = vadd.xlane.f32.xlu0 %v781
  %v783 = vpop.xlane.xlu0 %782
  %v784 = vsel %vm240, %v742, 0.0
  %785 = vadd.xlane.f32.xlu0 %v784
  %v786 = vpop.xlane.xlu0 %785
  %v787 = vsel %vm240, %v743, 0.0
  %788 = vadd.xlane.f32.xlu0 %v787
  %v789 = vpop.xlane.xlu0 %788
  %v790 = vsel %vm240, %v744, 0.0
  %791 = vadd.xlane.f32.xlu0 %v790
  %v792 = vpop.xlane.xlu0 %791
  %vm793 = vcmask 7168
  %v794 = vsel %vm793, %v243, %v495
  %v795 = vsel %vm793, %v246, %v498
  %v796 = vsel %vm793, %v249, %v501
  %v797 = vsel %vm793, %v252, %v504
  %v798 = vsel %vm793, %v255, %v507
  %v799 = vsel %vm793, %v258, %v510
  %v800 = vsel %vm793, %v261, %v513
  %v801 = vsel %vm793, %v264, %v516
  %v802 = vsel %vm793, %v267, %v519
  %v803 = vsel %vm793, %v270, %v522
  %v804 = vsel %vm793, %v273, %v525
  %v805 = vsel %vm793, %v276, %v528
  %v806 = vsel %vm793, %v279, %v531
  %v807 = vsel %vm793, %v282, %v534
  %v808 = vsel %vm793, %v285, %v537
  %v809 = vsel %vm793, %v288, %v540
  %vm810 = vcmask 15360
  %v811 = vsel %vm810, %v794, %v747
  %v812 = vsel %vm810, %v795, %v750
  %v813 = vsel %vm810, %v796, %v753
  %v814 = vsel %vm810, %v797, %v756
  %v815 = vsel %vm810, %v798, %v759
  %v816 = vsel %vm810, %v799, %v762
  %v817 = vsel %vm810, %v800, %v765
  %v818 = vsel %vm810, %v801, %v768
  %v819 = vsel %vm810, %v802, %v771
  %v820 = vsel %vm810, %v803, %v774
  %v821 = vsel %vm810, %v804, %v777
  %v822 = vsel %vm810, %v805, %v780
  %v823 = vsel %vm810, %v806, %v783
  %v824 = vsel %vm810, %v807, %v786
  %v825 = vsel %vm810, %v808, %v789
  %v826 = vsel %vm810, %v809, %v792
  %v827 = vld [vmem:[%s6] sm:$0x1]
  %v829 = vlaneseq
  %v830 = vshrl.u32 %v829, 7
  %v831 = vsub.s32 0, %v830
  %v832 = vrot.slane %v827, %v831
  %v834 = vadd.f32 %v811, %v832
  %v835 = vadd.f32 %v812, %v832
  %v836 = vadd.f32 %v813, %v832
  %v837 = vadd.f32 %v814, %v832
  %v838 = vadd.f32 %v815, %v832
  %v839 = vadd.f32 %v816, %v832
  %v840 = vadd.f32 %v817, %v832
  %v841 = vadd.f32 %v818, %v832
  %v842 = vadd.f32 %v819, %v832
  %v843 = vadd.f32 %v820, %v832
  %v844 = vadd.f32 %v821, %v832
  %v845 = vadd.f32 %v822, %v832
  %v846 = vadd.f32 %v823, %v832
  %v847 = vadd.f32 %v824, %v832
  %v848 = vadd.f32 %v825, %v832
  %v849 = vadd.f32 %v826, %v832
  %v850 = vtanh.pop %v834
  %v851 = vtanh.pop %v835
  %v852 = vtanh.pop %v836
  %v853 = vtanh.pop %v837
  %v854 = vtanh.pop %v838
  %v855 = vtanh.pop %v839
  %v856 = vtanh.pop %v840
  %v857 = vtanh.pop %v841
  %v858 = vtanh.pop %v842
  %v859 = vtanh.pop %v843
  %v860 = vtanh.pop %v844
  %v861 = vtanh.pop %v845
  %v862 = vtanh.pop %v846
  %v863 = vtanh.pop %v847
  %v864 = vtanh.pop %v848
  %v865 = vtanh.pop %v849
  %v866 = vmul.f32 %v850, 10.0
  %v867 = vmul.f32 %v851, 10.0
  %v868 = vmul.f32 %v852, 10.0
  %v869 = vmul.f32 %v853, 10.0
  %v870 = vmul.f32 %v854, 10.0
  %v871 = vmul.f32 %v855, 10.0
  %v872 = vmul.f32 %v856, 10.0
  %v873 = vmul.f32 %v857, 10.0
  %v874 = vmul.f32 %v858, 10.0
  %v875 = vmul.f32 %v859, 10.0
  %v876 = vmul.f32 %v860, 10.0
  %v877 = vmul.f32 %v861, 10.0
  %v878 = vmul.f32 %v862, 10.0
  %v879 = vmul.f32 %v863, 10.0
  %v880 = vmul.f32 %v864, 10.0
  %v881 = vmul.f32 %v865, 10.0
  %v882 = vld [vmem:[%s7] sm:$0x1]
  %v884 = vlaneseq
  %v885 = vshrl.u32 %v884, 7
  %v886 = vsub.s32 0, %v885
  %v887 = vrot.slane %v882, %v886
  %v889 = vadd.f32 %v866, %v887
  %v890 = vadd.f32 %v867, %v887
  %v891 = vadd.f32 %v868, %v887
  %v892 = vadd.f32 %v869, %v887
  %v893 = vadd.f32 %v870, %v887
  %v894 = vadd.f32 %v871, %v887
  %v895 = vadd.f32 %v872, %v887
  %v896 = vadd.f32 %v873, %v887
  %v897 = vadd.f32 %v874, %v887
  %v898 = vadd.f32 %v875, %v887
  %v899 = vadd.f32 %v876, %v887
  %v900 = vadd.f32 %v877, %v887
  %v901 = vadd.f32 %v878, %v887
  %v902 = vadd.f32 %v879, %v887
  %v903 = vadd.f32 %v880, %v887
  %v904 = vadd.f32 %v881, %v887
  %v905 = vld [vmem:[%s8] sm:$0xff]
  %v906 = vld [vmem:[%s8 + $0x8] sm:$0xff]
  %v907 = vld [vmem:[%s8 + $0x10] sm:$0xff]
  %v908 = vld [vmem:[%s8 + $0x18] sm:$0xff]
  %v909 = vld [vmem:[%s8 + $0x20] sm:$0xff]
  %v910 = vld [vmem:[%s8 + $0x28] sm:$0xff]
  %v911 = vld [vmem:[%s8 + $0x30] sm:$0xff]
  %v912 = vld [vmem:[%s8 + $0x38] sm:$0xff]
  %v913 = vld [vmem:[%s8 + $0x40] sm:$0xff]
  %v914 = vld [vmem:[%s8 + $0x48] sm:$0xff]
  %v915 = vld [vmem:[%s8 + $0x50] sm:$0xff]
  %v916 = vld [vmem:[%s8 + $0x58] sm:$0xff]
  %v917 = vld [vmem:[%s8 + $0x60] sm:$0xff]
  %v918 = vld [vmem:[%s8 + $0x68] sm:$0xff]
  %v919 = vld [vmem:[%s8 + $0x70] sm:$0xff]
  %v920 = vld [vmem:[%s8 + $0x78] sm:$0xff]
  %v921 = vadd.f32 %v889, %v905
  %v922 = vadd.f32 %v890, %v906
  %v923 = vadd.f32 %v891, %v907
  %v924 = vadd.f32 %v892, %v908
  %v925 = vadd.f32 %v893, %v909
  %v926 = vadd.f32 %v894, %v910
  %v927 = vadd.f32 %v895, %v911
  %v928 = vadd.f32 %v896, %v912
  %v929 = vadd.f32 %v897, %v913
  %v930 = vadd.f32 %v898, %v914
  %v931 = vadd.f32 %v899, %v915
  %v932 = vadd.f32 %v900, %v916
  %v933 = vadd.f32 %v901, %v917
  %v934 = vadd.f32 %v902, %v918
  %v935 = vadd.f32 %v903, %v919
  %v936 = vadd.f32 %v904, %v920
  %v937 = vrcp.pop 0.2
  %v938 = vmul.f32 %v921, %v937
  %v939 = vmul.f32 %v922, %v937
  %v940 = vmul.f32 %v923, %v937
  %v941 = vmul.f32 %v924, %v937
  %v942 = vmul.f32 %v925, %v937
  %v943 = vmul.f32 %v926, %v937
  %v944 = vmul.f32 %v927, %v937
  %v945 = vmul.f32 %v928, %v937
  %v946 = vmul.f32 %v929, %v937
  %v947 = vmul.f32 %v930, %v937
  %v948 = vmul.f32 %v931, %v937
  %v949 = vmul.f32 %v932, %v937
  %v950 = vmul.f32 %v933, %v937
  %v951 = vmul.f32 %v934, %v937
  %v952 = vmul.f32 %v935, %v937
  %v953 = vmul.f32 %v936, %v937
  %v954 = vxor.u32 %v938, 2147483648
  %v955 = vxor.u32 %v939, 2147483648
  %v956 = vxor.u32 %v940, 2147483648
  %v957 = vxor.u32 %v941, 2147483648
  %v958 = vxor.u32 %v942, 2147483648
  %v959 = vxor.u32 %v943, 2147483648
  %v960 = vxor.u32 %v944, 2147483648
  %v961 = vxor.u32 %v945, 2147483648
  %v962 = vxor.u32 %v946, 2147483648
  %v963 = vxor.u32 %v947, 2147483648
  %v964 = vxor.u32 %v948, 2147483648
  %v965 = vxor.u32 %v949, 2147483648
  %v966 = vxor.u32 %v950, 2147483648
  %v967 = vxor.u32 %v951, 2147483648
  %v968 = vxor.u32 %v952, 2147483648
  %v969 = vxor.u32 %v953, 2147483648
  %v970 = vmul.f32 %v954, 1.442695
  %v971 = vpow.pop %v970
  %v972 = vmul.f32 %v955, 1.442695
  %v973 = vpow.pop %v972
  %v974 = vmul.f32 %v956, 1.442695
  %v975 = vpow.pop %v974
  %v976 = vmul.f32 %v957, 1.442695
  %v977 = vpow.pop %v976
  %v978 = vmul.f32 %v958, 1.442695
  %v979 = vpow.pop %v978
  %v980 = vmul.f32 %v959, 1.442695
  %v981 = vpow.pop %v980
  %v982 = vmul.f32 %v960, 1.442695
  %v983 = vpow.pop %v982
  %v984 = vmul.f32 %v961, 1.442695
  %v985 = vpow.pop %v984
  %v986 = vmul.f32 %v962, 1.442695
  %v987 = vpow.pop %v986
  %v988 = vmul.f32 %v963, 1.442695
  %v989 = vpow.pop %v988
  %v990 = vmul.f32 %v964, 1.442695
  %v991 = vpow.pop %v990
  %v992 = vmul.f32 %v965, 1.442695
  %v993 = vpow.pop %v992
  %v994 = vmul.f32 %v966, 1.442695
  %v995 = vpow.pop %v994
  %v996 = vmul.f32 %v967, 1.442695
  %v997 = vpow.pop %v996
  %v998 = vmul.f32 %v968, 1.442695
  %v999 = vpow.pop %v998
  %v1000 = vmul.f32 %v969, 1.442695
  %v1001 = vpow.pop %v1000
  %v1002 = vadd.f32 %v971, 1.0
  %v1003 = vadd.f32 %v973, 1.0
  %v1004 = vadd.f32 %v975, 1.0
  %v1005 = vadd.f32 %v977, 1.0
  %v1006 = vadd.f32 %v979, 1.0
  %v1007 = vadd.f32 %v981, 1.0
  %v1008 = vadd.f32 %v983, 1.0
  %v1009 = vadd.f32 %v985, 1.0
  %v1010 = vadd.f32 %v987, 1.0
  %v1011 = vadd.f32 %v989, 1.0
  %v1012 = vadd.f32 %v991, 1.0
  %v1013 = vadd.f32 %v993, 1.0
  %v1014 = vadd.f32 %v995, 1.0
  %v1015 = vadd.f32 %v997, 1.0
  %v1016 = vadd.f32 %v999, 1.0
  %v1017 = vadd.f32 %v1001, 1.0
  %v1018 = vrcp.pop %v1002
  %v1019 = vmul.f32 1.0, %v1018
  %v1020 = vrcp.pop %v1003
  %v1021 = vmul.f32 1.0, %v1020
  %v1022 = vrcp.pop %v1004
  %v1023 = vmul.f32 1.0, %v1022
  %v1024 = vrcp.pop %v1005
  %v1025 = vmul.f32 1.0, %v1024
  %v1026 = vrcp.pop %v1006
  %v1027 = vmul.f32 1.0, %v1026
  %v1028 = vrcp.pop %v1007
  %v1029 = vmul.f32 1.0, %v1028
  %v1030 = vrcp.pop %v1008
  %v1031 = vmul.f32 1.0, %v1030
  %v1032 = vrcp.pop %v1009
  %v1033 = vmul.f32 1.0, %v1032
  %v1034 = vrcp.pop %v1010
  %v1035 = vmul.f32 1.0, %v1034
  %v1036 = vrcp.pop %v1011
  %v1037 = vmul.f32 1.0, %v1036
  %v1038 = vrcp.pop %v1012
  %v1039 = vmul.f32 1.0, %v1038
  %v1040 = vrcp.pop %v1013
  %v1041 = vmul.f32 1.0, %v1040
  %v1042 = vrcp.pop %v1014
  %v1043 = vmul.f32 1.0, %v1042
  %v1044 = vrcp.pop %v1015
  %v1045 = vmul.f32 1.0, %v1044
  %v1046 = vrcp.pop %v1016
  %v1047 = vmul.f32 1.0, %v1046
  %v1048 = vrcp.pop %v1017
  %v1049 = vmul.f32 1.0, %v1048
  %v1050 = vmul.f32 %v1019, 1.2
  %v1051 = vmul.f32 %v1021, 1.2
  %v1052 = vmul.f32 %v1023, 1.2
  %v1053 = vmul.f32 %v1025, 1.2
  %v1054 = vmul.f32 %v1027, 1.2
  %v1055 = vmul.f32 %v1029, 1.2
  %v1056 = vmul.f32 %v1031, 1.2
  %v1057 = vmul.f32 %v1033, 1.2
  %v1058 = vmul.f32 %v1035, 1.2
  %v1059 = vmul.f32 %v1037, 1.2
  %v1060 = vmul.f32 %v1039, 1.2
  %v1061 = vmul.f32 %v1041, 1.2
  %v1062 = vmul.f32 %v1043, 1.2
  %v1063 = vmul.f32 %v1045, 1.2
  %v1064 = vmul.f32 %v1047, 1.2
  %v1065 = vmul.f32 %v1049, 1.2
  %v1066 = vadd.f32 %v1050, -0.2
  %v1067 = vadd.f32 %v1051, -0.2
  %v1068 = vadd.f32 %v1052, -0.2
  %v1069 = vadd.f32 %v1053, -0.2
  %v1070 = vadd.f32 %v1054, -0.2
  %v1071 = vadd.f32 %v1055, -0.2
  %v1072 = vadd.f32 %v1056, -0.2
  %v1073 = vadd.f32 %v1057, -0.2
  %v1074 = vadd.f32 %v1058, -0.2
  %v1075 = vadd.f32 %v1059, -0.2
  %v1076 = vadd.f32 %v1060, -0.2
  %v1077 = vadd.f32 %v1061, -0.2
  %v1078 = vadd.f32 %v1062, -0.2
  %v1079 = vadd.f32 %v1063, -0.2
  %v1080 = vadd.f32 %v1064, -0.2
  %v1081 = vadd.f32 %v1065, -0.2
  %v1082 = vmax.f32 %v1066, 0.0
  %v1083 = vmax.f32 %v1067, 0.0
  %v1084 = vmax.f32 %v1068, 0.0
  %v1085 = vmax.f32 %v1069, 0.0
  %v1086 = vmax.f32 %v1070, 0.0
  %v1087 = vmax.f32 %v1071, 0.0
  %v1088 = vmax.f32 %v1072, 0.0
  %v1089 = vmax.f32 %v1073, 0.0
  %v1090 = vmax.f32 %v1074, 0.0
  %v1091 = vmax.f32 %v1075, 0.0
  %v1092 = vmax.f32 %v1076, 0.0
  %v1093 = vmax.f32 %v1077, 0.0
  %v1094 = vmax.f32 %v1078, 0.0
  %v1095 = vmax.f32 %v1079, 0.0
  %v1096 = vmax.f32 %v1080, 0.0
  %v1097 = vmax.f32 %v1081, 0.0
  %v1098 = vmin.f32 %v1082, 1.0
  %v1099 = vmin.f32 %v1083, 1.0
  %v1100 = vmin.f32 %v1084, 1.0
  %v1101 = vmin.f32 %v1085, 1.0
  %v1102 = vmin.f32 %v1086, 1.0
  %v1103 = vmin.f32 %v1087, 1.0
  %v1104 = vmin.f32 %v1088, 1.0
  %v1105 = vmin.f32 %v1089, 1.0
  %v1106 = vmin.f32 %v1090, 1.0
  %v1107 = vmin.f32 %v1091, 1.0
  %v1108 = vmin.f32 %v1092, 1.0
  %v1109 = vmin.f32 %v1093, 1.0
  %v1110 = vmin.f32 %v1094, 1.0
  %v1111 = vmin.f32 %v1095, 1.0
  %v1112 = vmin.f32 %v1096, 1.0
  %v1113 = vmin.f32 %v1097, 1.0
  %vm1114 = vcmask 23552
  %1115 = vst.msk [vmem:[%s10] sm:$0xff] %vm1114, %v1098
  %1116 = vst.msk [vmem:[%s10 + $0x8] sm:$0xff] %vm1114, %v1099
  %1117 = vst.msk [vmem:[%s10 + $0x10] sm:$0xff] %vm1114, %v1100
  %1118 = vst.msk [vmem:[%s10 + $0x18] sm:$0xff] %vm1114, %v1101
  %1119 = vst.msk [vmem:[%s10 + $0x20] sm:$0xff] %vm1114, %v1102
  %1120 = vst.msk [vmem:[%s10 + $0x28] sm:$0xff] %vm1114, %v1103
  %1121 = vst.msk [vmem:[%s10 + $0x30] sm:$0xff] %vm1114, %v1104
  %1122 = vst.msk [vmem:[%s10 + $0x38] sm:$0xff] %vm1114, %v1105
  %1123 = vst.msk [vmem:[%s10 + $0x40] sm:$0xff] %vm1114, %v1106
  %1124 = vst.msk [vmem:[%s10 + $0x48] sm:$0xff] %vm1114, %v1107
  %1125 = vst.msk [vmem:[%s10 + $0x50] sm:$0xff] %vm1114, %v1108
  %1126 = vst.msk [vmem:[%s10 + $0x58] sm:$0xff] %vm1114, %v1109
  %1127 = vst.msk [vmem:[%s10 + $0x60] sm:$0xff] %vm1114, %v1110
  %1128 = vst.msk [vmem:[%s10 + $0x68] sm:$0xff] %vm1114, %v1111
  %1129 = vst.msk [vmem:[%s10 + $0x70] sm:$0xff] %vm1114, %v1112
  %1130 = vst.msk [vmem:[%s10 + $0x78] sm:$0xff] %vm1114, %v1113
  %v1131 = vsub.f32 -0.32188758, %v889
  %v1132 = vsub.f32 -0.32188758, %v890
  %v1133 = vsub.f32 -0.32188758, %v891
  %v1134 = vsub.f32 -0.32188758, %v892
  %v1135 = vsub.f32 -0.32188758, %v893
  %v1136 = vsub.f32 -0.32188758, %v894
  %v1137 = vsub.f32 -0.32188758, %v895
  %v1138 = vsub.f32 -0.32188758, %v896
  %v1139 = vsub.f32 -0.32188758, %v897
  %v1140 = vsub.f32 -0.32188758, %v898
  %v1141 = vsub.f32 -0.32188758, %v899
  %v1142 = vsub.f32 -0.32188758, %v900
  %v1143 = vsub.f32 -0.32188758, %v901
  %v1144 = vsub.f32 -0.32188758, %v902
  %v1145 = vsub.f32 -0.32188758, %v903
  %v1146 = vsub.f32 -0.32188758, %v904
  %v1147 = vmax.f32 %v1131, 0.0
  %v1148 = vmax.f32 %v1132, 0.0
  %v1149 = vmax.f32 %v1133, 0.0
  %v1150 = vmax.f32 %v1134, 0.0
  %v1151 = vmax.f32 %v1135, 0.0
  %v1152 = vmax.f32 %v1136, 0.0
  %v1153 = vmax.f32 %v1137, 0.0
  %v1154 = vmax.f32 %v1138, 0.0
  %v1155 = vmax.f32 %v1139, 0.0
  %v1156 = vmax.f32 %v1140, 0.0
  %v1157 = vmax.f32 %v1141, 0.0
  %v1158 = vmax.f32 %v1142, 0.0
  %v1159 = vmax.f32 %v1143, 0.0
  %v1160 = vmax.f32 %v1144, 0.0
  %v1161 = vmax.f32 %v1145, 0.0
  %v1162 = vmax.f32 %v1146, 0.0
  %vm1163 = vcmp.ne.f32.partialorder %v1131, %v1131
  %vm1164 = vcmp.ne.f32.partialorder %v1132, %v1132
  %vm1165 = vcmp.ne.f32.partialorder %v1133, %v1133
  %vm1166 = vcmp.ne.f32.partialorder %v1134, %v1134
  %vm1167 = vcmp.ne.f32.partialorder %v1135, %v1135
  %vm1168 = vcmp.ne.f32.partialorder %v1136, %v1136
  %vm1169 = vcmp.ne.f32.partialorder %v1137, %v1137
  %vm1170 = vcmp.ne.f32.partialorder %v1138, %v1138
  %vm1171 = vcmp.ne.f32.partialorder %v1139, %v1139
  %vm1172 = vcmp.ne.f32.partialorder %v1140, %v1140
  %vm1173 = vcmp.ne.f32.partialorder %v1141, %v1141
  %vm1174 = vcmp.ne.f32.partialorder %v1142, %v1142
  %vm1175 = vcmp.ne.f32.partialorder %v1143, %v1143
  %vm1176 = vcmp.ne.f32.partialorder %v1144, %v1144
  %vm1177 = vcmp.ne.f32.partialorder %v1145, %v1145
  %vm1178 = vcmp.ne.f32.partialorder %v1146, %v1146
  %v1179 = vadd.f32 %v1131, 0.0
  %v1180 = vadd.f32 %v1132, 0.0
  %v1181 = vadd.f32 %v1133, 0.0
  %v1182 = vadd.f32 %v1134, 0.0
  %v1183 = vadd.f32 %v1135, 0.0
  %v1184 = vadd.f32 %v1136, 0.0
  %v1185 = vadd.f32 %v1137, 0.0
  %v1186 = vadd.f32 %v1138, 0.0
  %v1187 = vadd.f32 %v1139, 0.0
  %v1188 = vadd.f32 %v1140, 0.0
  %v1189 = vadd.f32 %v1141, 0.0
  %v1190 = vadd.f32 %v1142, 0.0
  %v1191 = vadd.f32 %v1143, 0.0
  %v1192 = vadd.f32 %v1144, 0.0
  %v1193 = vadd.f32 %v1145, 0.0
  %v1194 = vadd.f32 %v1146, 0.0
  %v1195 = vand.u32 2147483647, %v1131
  %v1196 = vand.u32 2147483647, %v1132
  %v1197 = vand.u32 2147483647, %v1133
  %v1198 = vand.u32 2147483647, %v1134
  %v1199 = vand.u32 2147483647, %v1135
  %v1200 = vand.u32 2147483647, %v1136
  %v1201 = vand.u32 2147483647, %v1137
  %v1202 = vand.u32 2147483647, %v1138
  %v1203 = vand.u32 2147483647, %v1139
  %v1204 = vand.u32 2147483647, %v1140
  %v1205 = vand.u32 2147483647, %v1141
  %v1206 = vand.u32 2147483647, %v1142
  %v1207 = vand.u32 2147483647, %v1143
  %v1208 = vand.u32 2147483647, %v1144
  %v1209 = vand.u32 2147483647, %v1145
  %v1210 = vand.u32 2147483647, %v1146
  %v1211 = vsub.f32 0.0, %v1195
  %v1212 = vsub.f32 0.0, %v1196
  %v1213 = vsub.f32 0.0, %v1197
  %v1214 = vsub.f32 0.0, %v1198
  %v1215 = vsub.f32 0.0, %v1199
  %v1216 = vsub.f32 0.0, %v1200
  %v1217 = vsub.f32 0.0, %v1201
  %v1218 = vsub.f32 0.0, %v1202
  %v1219 = vsub.f32 0.0, %v1203
  %v1220 = vsub.f32 0.0, %v1204
  %v1221 = vsub.f32 0.0, %v1205
  %v1222 = vsub.f32 0.0, %v1206
  %v1223 = vsub.f32 0.0, %v1207
  %v1224 = vsub.f32 0.0, %v1208
  %v1225 = vsub.f32 0.0, %v1209
  %v1226 = vsub.f32 0.0, %v1210
  %v1227 = vmul.f32 %v1211, 1.442695
  %v1228 = vpow.pop %v1227
  %v1229 = vmul.f32 %v1212, 1.442695
  %v1230 = vpow.pop %v1229
  %v1231 = vmul.f32 %v1213, 1.442695
  %v1232 = vpow.pop %v1231
  %v1233 = vmul.f32 %v1214, 1.442695
  %v1234 = vpow.pop %v1233
  %v1235 = vmul.f32 %v1215, 1.442695
  %v1236 = vpow.pop %v1235
  %v1237 = vmul.f32 %v1216, 1.442695
  %v1238 = vpow.pop %v1237
  %v1239 = vmul.f32 %v1217, 1.442695
  %v1240 = vpow.pop %v1239
  %v1241 = vmul.f32 %v1218, 1.442695
  %v1242 = vpow.pop %v1241
  %v1243 = vmul.f32 %v1219, 1.442695
  %v1244 = vpow.pop %v1243
  %v1245 = vmul.f32 %v1220, 1.442695
  %v1246 = vpow.pop %v1245
  %v1247 = vmul.f32 %v1221, 1.442695
  %v1248 = vpow.pop %v1247
  %v1249 = vmul.f32 %v1222, 1.442695
  %v1250 = vpow.pop %v1249
  %v1251 = vmul.f32 %v1223, 1.442695
  %v1252 = vpow.pop %v1251
  %v1253 = vmul.f32 %v1224, 1.442695
  %v1254 = vpow.pop %v1253
  %v1255 = vmul.f32 %v1225, 1.442695
  %v1256 = vpow.pop %v1255
  %v1257 = vmul.f32 %v1226, 1.442695
  %v1258 = vpow.pop %v1257
  %v1259 = vadd.f32 %v1228, 1.0
  %v1260 = vlog2.pop %v1259
  %v1261 = vmul.f32 %v1260, 0.6931472
  %v1262 = vmul.f32 -0.5, %v1228
  %v1263 = vadd.f32 %v1262, 1.0
  %v1264 = vmul.f32 %v1263, %v1228
  %v1265 = vand.u32 2147483647, %v1228
  %vm1266 = vcmp.lt.f32.partialorder %v1265, 0.0004427343
  %v1267 = vsel %vm1266, %v1264, %v1261
  %v1268 = vadd.f32 %v1230, 1.0
  %v1269 = vlog2.pop %v1268
  %v1270 = vmul.f32 %v1269, 0.6931472
  %v1271 = vmul.f32 -0.5, %v1230
  %v1272 = vadd.f32 %v1271, 1.0
  %v1273 = vmul.f32 %v1272, %v1230
  %v1274 = vand.u32 2147483647, %v1230
  %vm1275 = vcmp.lt.f32.partialorder %v1274, 0.0004427343
  %v1276 = vsel %vm1275, %v1273, %v1270
  %v1277 = vadd.f32 %v1232, 1.0
  %v1278 = vlog2.pop %v1277
  %v1279 = vmul.f32 %v1278, 0.6931472
  %v1280 = vmul.f32 -0.5, %v1232
  %v1281 = vadd.f32 %v1280, 1.0
  %v1282 = vmul.f32 %v1281, %v1232
  %v1283 = vand.u32 2147483647, %v1232
  %vm1284 = vcmp.lt.f32.partialorder %v1283, 0.0004427343
  %v1285 = vsel %vm1284, %v1282, %v1279
  %v1286 = vadd.f32 %v1234, 1.0
  %v1287 = vlog2.pop %v1286
  %v1288 = vmul.f32 %v1287, 0.6931472
  %v1289 = vmul.f32 -0.5, %v1234
  %v1290 = vadd.f32 %v1289, 1.0
  %v1291 = vmul.f32 %v1290, %v1234
  %v1292 = vand.u32 2147483647, %v1234
  %vm1293 = vcmp.lt.f32.partialorder %v1292, 0.0004427343
  %v1294 = vsel %vm1293, %v1291, %v1288
  %v1295 = vadd.f32 %v1236, 1.0
  %v1296 = vlog2.pop %v1295
  %v1297 = vmul.f32 %v1296, 0.6931472
  %v1298 = vmul.f32 -0.5, %v1236
  %v1299 = vadd.f32 %v1298, 1.0
  %v1300 = vmul.f32 %v1299, %v1236
  %v1301 = vand.u32 2147483647, %v1236
  %vm1302 = vcmp.lt.f32.partialorder %v1301, 0.0004427343
  %v1303 = vsel %vm1302, %v1300, %v1297
  %v1304 = vadd.f32 %v1238, 1.0
  %v1305 = vlog2.pop %v1304
  %v1306 = vmul.f32 %v1305, 0.6931472
  %v1307 = vmul.f32 -0.5, %v1238
  %v1308 = vadd.f32 %v1307, 1.0
  %v1309 = vmul.f32 %v1308, %v1238
  %v1310 = vand.u32 2147483647, %v1238
  %vm1311 = vcmp.lt.f32.partialorder %v1310, 0.0004427343
  %v1312 = vsel %vm1311, %v1309, %v1306
  %v1313 = vadd.f32 %v1240, 1.0
  %v1314 = vlog2.pop %v1313
  %v1315 = vmul.f32 %v1314, 0.6931472
  %v1316 = vmul.f32 -0.5, %v1240
  %v1317 = vadd.f32 %v1316, 1.0
  %v1318 = vmul.f32 %v1317, %v1240
  %v1319 = vand.u32 2147483647, %v1240
  %vm1320 = vcmp.lt.f32.partialorder %v1319, 0.0004427343
  %v1321 = vsel %vm1320, %v1318, %v1315
  %v1322 = vadd.f32 %v1242, 1.0
  %v1323 = vlog2.pop %v1322
  %v1324 = vmul.f32 %v1323, 0.6931472
  %v1325 = vmul.f32 -0.5, %v1242
  %v1326 = vadd.f32 %v1325, 1.0
  %v1327 = vmul.f32 %v1326, %v1242
  %v1328 = vand.u32 2147483647, %v1242
  %vm1329 = vcmp.lt.f32.partialorder %v1328, 0.0004427343
  %v1330 = vsel %vm1329, %v1327, %v1324
  %v1331 = vadd.f32 %v1244, 1.0
  %v1332 = vlog2.pop %v1331
  %v1333 = vmul.f32 %v1332, 0.6931472
  %v1334 = vmul.f32 -0.5, %v1244
  %v1335 = vadd.f32 %v1334, 1.0
  %v1336 = vmul.f32 %v1335, %v1244
  %v1337 = vand.u32 2147483647, %v1244
  %vm1338 = vcmp.lt.f32.partialorder %v1337, 0.0004427343
  %v1339 = vsel %vm1338, %v1336, %v1333
  %v1340 = vadd.f32 %v1246, 1.0
  %v1341 = vlog2.pop %v1340
  %v1342 = vmul.f32 %v1341, 0.6931472
  %v1343 = vmul.f32 -0.5, %v1246
  %v1344 = vadd.f32 %v1343, 1.0
  %v1345 = vmul.f32 %v1344, %v1246
  %v1346 = vand.u32 2147483647, %v1246
  %vm1347 = vcmp.lt.f32.partialorder %v1346, 0.0004427343
  %v1348 = vsel %vm1347, %v1345, %v1342
  %v1349 = vadd.f32 %v1248, 1.0
  %v1350 = vlog2.pop %v1349
  %v1351 = vmul.f32 %v1350, 0.6931472
  %v1352 = vmul.f32 -0.5, %v1248
  %v1353 = vadd.f32 %v1352, 1.0
  %v1354 = vmul.f32 %v1353, %v1248
  %v1355 = vand.u32 2147483647, %v1248
  %vm1356 = vcmp.lt.f32.partialorder %v1355, 0.0004427343
  %v1357 = vsel %vm1356, %v1354, %v1351
  %v1358 = vadd.f32 %v1250, 1.0
  %v1359 = vlog2.pop %v1358
  %v1360 = vmul.f32 %v1359, 0.6931472
  %v1361 = vmul.f32 -0.5, %v1250
  %v1362 = vadd.f32 %v1361, 1.0
  %v1363 = vmul.f32 %v1362, %v1250
  %v1364 = vand.u32 2147483647, %v1250
  %vm1365 = vcmp.lt.f32.partialorder %v1364, 0.0004427343
  %v1366 = vsel %vm1365, %v1363, %v1360
  %v1367 = vadd.f32 %v1252, 1.0
  %v1368 = vlog2.pop %v1367
  %v1369 = vmul.f32 %v1368, 0.6931472
  %v1370 = vmul.f32 -0.5, %v1252
  %v1371 = vadd.f32 %v1370, 1.0
  %v1372 = vmul.f32 %v1371, %v1252
  %v1373 = vand.u32 2147483647, %v1252
  %vm1374 = vcmp.lt.f32.partialorder %v1373, 0.0004427343
  %v1375 = vsel %vm1374, %v1372, %v1369
  %v1376 = vadd.f32 %v1254, 1.0
  %v1377 = vlog2.pop %v1376
  %v1378 = vmul.f32 %v1377, 0.6931472
  %v1379 = vmul.f32 -0.5, %v1254
  %v1380 = vadd.f32 %v1379, 1.0
  %v1381 = vmul.f32 %v1380, %v1254
  %v1382 = vand.u32 2147483647, %v1254
  %vm1383 = vcmp.lt.f32.partialorder %v1382, 0.0004427343
  %v1384 = vsel %vm1383, %v1381, %v1378
  %v1385 = vadd.f32 %v1256, 1.0
  %v1386 = vlog2.pop %v1385
  %v1387 = vmul.f32 %v1386, 0.6931472
  %v1388 = vmul.f32 -0.5, %v1256
  %v1389 = vadd.f32 %v1388, 1.0
  %v1390 = vmul.f32 %v1389, %v1256
  %v1391 = vand.u32 2147483647, %v1256
  %vm1392 = vcmp.lt.f32.partialorder %v1391, 0.0004427343
  %v1393 = vsel %vm1392, %v1390, %v1387
  %v1394 = vadd.f32 %v1258, 1.0
  %v1395 = vlog2.pop %v1394
  %v1396 = vmul.f32 %v1395, 0.6931472
  %v1397 = vmul.f32 -0.5, %v1258
  %v1398 = vadd.f32 %v1397, 1.0
  %v1399 = vmul.f32 %v1398, %v1258
  %v1400 = vand.u32 2147483647, %v1258
  %vm1401 = vcmp.lt.f32.partialorder %v1400, 0.0004427343
  %v1402 = vsel %vm1401, %v1399, %v1396
  %v1403 = vadd.f32 %v1147, %v1267
  %v1404 = vadd.f32 %v1148, %v1276
  %v1405 = vadd.f32 %v1149, %v1285
  %v1406 = vadd.f32 %v1150, %v1294
  %v1407 = vadd.f32 %v1151, %v1303
  %v1408 = vadd.f32 %v1152, %v1312
  %v1409 = vadd.f32 %v1153, %v1321
  %v1410 = vadd.f32 %v1154, %v1330
  %v1411 = vadd.f32 %v1155, %v1339
  %v1412 = vadd.f32 %v1156, %v1348
  %v1413 = vadd.f32 %v1157, %v1357
  %v1414 = vadd.f32 %v1158, %v1366
  %v1415 = vadd.f32 %v1159, %v1375
  %v1416 = vadd.f32 %v1160, %v1384
  %v1417 = vadd.f32 %v1161, %v1393
  %v1418 = vadd.f32 %v1162, %v1402
  %v1419 = vsel %vm1163, %v1179, %v1403
  %v1420 = vsel %vm1164, %v1180, %v1404
  %v1421 = vsel %vm1165, %v1181, %v1405
  %v1422 = vsel %vm1166, %v1182, %v1406
  %v1423 = vsel %vm1167, %v1183, %v1407
  %v1424 = vsel %vm1168, %v1184, %v1408
  %v1425 = vsel %vm1169, %v1185, %v1409
  %v1426 = vsel %vm1170, %v1186, %v1410
  %v1427 = vsel %vm1171, %v1187, %v1411
  %v1428 = vsel %vm1172, %v1188, %v1412
  %v1429 = vsel %vm1173, %v1189, %v1413
  %v1430 = vsel %vm1174, %v1190, %v1414
  %v1431 = vsel %vm1175, %v1191, %v1415
  %v1432 = vsel %vm1176, %v1192, %v1416
  %v1433 = vsel %vm1177, %v1193, %v1417
  %v1434 = vsel %vm1178, %v1194, %v1418
  %v1435 = vsub.f32 0.0, %v1419
  %v1436 = vsub.f32 0.0, %v1420
  %v1437 = vsub.f32 0.0, %v1421
  %v1438 = vsub.f32 0.0, %v1422
  %v1439 = vsub.f32 0.0, %v1423
  %v1440 = vsub.f32 0.0, %v1424
  %v1441 = vsub.f32 0.0, %v1425
  %v1442 = vsub.f32 0.0, %v1426
  %v1443 = vsub.f32 0.0, %v1427
  %v1444 = vsub.f32 0.0, %v1428
  %v1445 = vsub.f32 0.0, %v1429
  %v1446 = vsub.f32 0.0, %v1430
  %v1447 = vsub.f32 0.0, %v1431
  %v1448 = vsub.f32 0.0, %v1432
  %v1449 = vsub.f32 0.0, %v1433
  %v1450 = vsub.f32 0.0, %v1434
  %1451 = vst.msk [vmem:[%s11] sm:$0xff] %vm1114, %v1435
  %1452 = vst.msk [vmem:[%s11 + $0x8] sm:$0xff] %vm1114, %v1436
  %1453 = vst.msk [vmem:[%s11 + $0x10] sm:$0xff] %vm1114, %v1437
  %1454 = vst.msk [vmem:[%s11 + $0x18] sm:$0xff] %vm1114, %v1438
  %1455 = vst.msk [vmem:[%s11 + $0x20] sm:$0xff] %vm1114, %v1439
  %1456 = vst.msk [vmem:[%s11 + $0x28] sm:$0xff] %vm1114, %v1440
  %1457 = vst.msk [vmem:[%s11 + $0x30] sm:$0xff] %vm1114, %v1441
  %1458 = vst.msk [vmem:[%s11 + $0x38] sm:$0xff] %vm1114, %v1442
  %1459 = vst.msk [vmem:[%s11 + $0x40] sm:$0xff] %vm1114, %v1443
  %1460 = vst.msk [vmem:[%s11 + $0x48] sm:$0xff] %vm1114, %v1444
  %1461 = vst.msk [vmem:[%s11 + $0x50] sm:$0xff] %vm1114, %v1445
  %1462 = vst.msk [vmem:[%s11 + $0x58] sm:$0xff] %vm1114, %v1446
  %1463 = vst.msk [vmem:[%s11 + $0x60] sm:$0xff] %vm1114, %v1447
  %1464 = vst.msk [vmem:[%s11 + $0x68] sm:$0xff] %vm1114, %v1448
  %1465 = vst.msk [vmem:[%s11 + $0x70] sm:$0xff] %vm1114, %v1449
  %1466 = vst.msk [vmem:[%s11 + $0x78] sm:$0xff] %vm1114, %v1450
  %1468 = vset.pattern.permute.xlu0 0
  %1469 = vperm.xlu0 %1468, %v1098
  %v1470 = vpop.permute.xlu0 %1469
  %1473 = vset.pattern.permute.xlu0 0
  %1474 = vperm.xlu0 %1473, %v1099
  %v1475 = vpop.permute.xlu0 %1474
  %1478 = vset.pattern.permute.xlu0 0
  %1479 = vperm.xlu0 %1478, %v1100
  %v1480 = vpop.permute.xlu0 %1479
  %1483 = vset.pattern.permute.xlu0 0
  %1484 = vperm.xlu0 %1483, %v1101
  %v1485 = vpop.permute.xlu0 %1484
  %1488 = vset.pattern.permute.xlu0 0
  %1489 = vperm.xlu0 %1488, %v1102
  %v1490 = vpop.permute.xlu0 %1489
  %1493 = vset.pattern.permute.xlu0 0
  %1494 = vperm.xlu0 %1493, %v1103
  %v1495 = vpop.permute.xlu0 %1494
  %1498 = vset.pattern.permute.xlu0 0
  %1499 = vperm.xlu0 %1498, %v1104
  %v1500 = vpop.permute.xlu0 %1499
  %1503 = vset.pattern.permute.xlu0 0
  %1504 = vperm.xlu0 %1503, %v1105
  %v1505 = vpop.permute.xlu0 %1504
  %1508 = vset.pattern.permute.xlu0 0
  %1509 = vperm.xlu0 %1508, %v1106
  %v1510 = vpop.permute.xlu0 %1509
  %1513 = vset.pattern.permute.xlu0 0
  %1514 = vperm.xlu0 %1513, %v1107
  %v1515 = vpop.permute.xlu0 %1514
  %1518 = vset.pattern.permute.xlu0 0
  %1519 = vperm.xlu0 %1518, %v1108
  %v1520 = vpop.permute.xlu0 %1519
  %1523 = vset.pattern.permute.xlu0 0
  %1524 = vperm.xlu0 %1523, %v1109
  %v1525 = vpop.permute.xlu0 %1524
  %1528 = vset.pattern.permute.xlu0 0
  %1529 = vperm.xlu0 %1528, %v1110
  %v1530 = vpop.permute.xlu0 %1529
  %1533 = vset.pattern.permute.xlu0 0
  %1534 = vperm.xlu0 %1533, %v1111
  %v1535 = vpop.permute.xlu0 %1534
  %1538 = vset.pattern.permute.xlu0 0
  %1539 = vperm.xlu0 %1538, %v1112
  %v1540 = vpop.permute.xlu0 %1539
  %1543 = vset.pattern.permute.xlu0 0
  %1544 = vperm.xlu0 %1543, %v1113
  %v1545 = vpop.permute.xlu0 %1544
  %v1547 = vmul.f32 %v36, %v1470
  %v1548 = vmul.f32 %v37, %v1475
  %v1549 = vmul.f32 %v38, %v1480
  %v1550 = vmul.f32 %v39, %v1485
  %v1551 = vmul.f32 %v40, %v1490
  %v1552 = vmul.f32 %v41, %v1495
  %v1553 = vmul.f32 %v42, %v1500
  %v1554 = vmul.f32 %v43, %v1505
  %v1555 = vmul.f32 %v44, %v1510
  %v1556 = vmul.f32 %v45, %v1515
  %v1557 = vmul.f32 %v46, %v1520
  %v1558 = vmul.f32 %v47, %v1525
  %v1559 = vmul.f32 %v48, %v1530
  %v1560 = vmul.f32 %v49, %v1535
  %v1561 = vmul.f32 %v50, %v1540
  %v1562 = vmul.f32 %v51, %v1545
  %1563 = vst.msk [vmem:[%s9] sm:$0xff] %vm81, %v1547
  %1564 = vst.msk [vmem:[%s9 + $0x8] sm:$0xff] %vm81, %v1548
  %1565 = vst.msk [vmem:[%s9 + $0x10] sm:$0xff] %vm81, %v1549
  %1566 = vst.msk [vmem:[%s9 + $0x18] sm:$0xff] %vm81, %v1550
  %1567 = vst.msk [vmem:[%s9 + $0x20] sm:$0xff] %vm81, %v1551
  %1568 = vst.msk [vmem:[%s9 + $0x28] sm:$0xff] %vm81, %v1552
  %1569 = vst.msk [vmem:[%s9 + $0x30] sm:$0xff] %vm81, %v1553
  %1570 = vst.msk [vmem:[%s9 + $0x38] sm:$0xff] %vm81, %v1554
  %1571 = vst.msk [vmem:[%s9 + $0x40] sm:$0xff] %vm81, %v1555
  %1572 = vst.msk [vmem:[%s9 + $0x48] sm:$0xff] %vm81, %v1556
  %1573 = vst.msk [vmem:[%s9 + $0x50] sm:$0xff] %vm81, %v1557
  %1574 = vst.msk [vmem:[%s9 + $0x58] sm:$0xff] %vm81, %v1558
  %1575 = vst.msk [vmem:[%s9 + $0x60] sm:$0xff] %vm81, %v1559
  %1576 = vst.msk [vmem:[%s9 + $0x68] sm:$0xff] %vm81, %v1560
  %1577 = vst.msk [vmem:[%s9 + $0x70] sm:$0xff] %vm81, %v1561
  %1578 = vst.msk [vmem:[%s9 + $0x78] sm:$0xff] %vm81, %v1562
  // Predicated region
  $region38: #{tpu_custom_call.1} parent=0 // pred_check
    _
  $region39: #{tpu_custom_call.1} parent=0 // pred_check_branch
    %1580 = sbr.rel (0) target = $region41
  $region40: #{tpu_custom_call.1} parent=0 // pred_region
    _
  $region41: #{tpu_custom_call.1} parent=0 // pred_fallthru
    _
  // Predicated region
  $region42: #{tpu_custom_call.1} parent=0 // pred_check
    _
  $region43: #{tpu_custom_call.1} parent=0 // pred_check_branch
    %1582 = sbr.rel (0) target = $region45
  $region44: #{tpu_custom_call.1} parent=0 // pred_region
    _
  $region45: #{tpu_custom_call.1} parent=0 // pred_fallthru
    _
  // Predicated region
  $region46: #{tpu_custom_call.1} parent=0 // pred_check
    _
  $region47: #{tpu_custom_call.1} parent=0 // pred_check_branch
    %1584 = sbr.rel (0) target = $region49
  $region48: #{tpu_custom_call.1} parent=0 // pred_region
    _
  $region49: #{tpu_custom_call.1} parent=0 // pred_fallthru
    _
  // Predicated region
  $region50: #{tpu_custom_call.1} parent=0 // pred_check
    _
  $region51: #{tpu_custom_call.1} parent=0 // pred_check_branch
    %1586 = sbr.rel (0) target = $region53
  $region52: #{tpu_custom_call.1} parent=0 // pred_region
    _
  $region53: #{tpu_custom_call.1} parent=0 // pred_fallthru
    _
  // Predicated region
  $region54: #{tpu_custom_call.1} parent=0 // pred_check
    _
  $region55: #{tpu_custom_call.1} parent=0 // pred_check_branch
    %1588 = sbr.rel (0) target = $region57
  $region56: #{tpu_custom_call.1} parent=0 // pred_region
    _
  $region57: #{tpu_custom_call.1} parent=0 // pred_fallthru
    _
  // Predicated region
  $region58: #{tpu_custom_call.1} parent=0 // pred_check
    _
  $region59: #{tpu_custom_call.1} parent=0 // pred_check_branch
    %1590 = sbr.rel (0) target = $region61
  $region60: #{tpu_custom_call.1} parent=0 // pred_region
    _
  $region61: #{tpu_custom_call.1} parent=0 // pred_fallthru
    _

</llo_original>
